<compile_context>
chip_gen: v7x
topology: tpu7x:2x2x1
jax: 0.10.0
libtpu: 0.0.40
codegen_flags: <defaults>
</compile_context>

<pallas_src>
import functools

import numpy as np
import jax
import jax.numpy as jnp
from jax.experimental import pallas as pl
from jax.experimental.pallas import tpu as pltpu


# ----------------------------------------------------------------------------
# Fused TrmBlock kernel (Bblk batch elements per grid step, rows flattened)
# ----------------------------------------------------------------------------
def _trm_block_kernel(x_ref, hmask_ref, smask_ref,
                      wqkv_ref, bqkv_ref, wo_ref, bo_ref,
                      g1_ref, be1_ref, wf1_ref, bf1_ref, wf2_ref, bf2_ref,
                      g2_ref, be2_ref, o_ref, *, num_heads, eps):
    f32 = jnp.float32
    Bblk, L, D = x_ref.shape
    M = Bblk * L                                   # flattened (batch, variate) rows
    P3 = wqkv_ref.shape[1]
    P = P3 // 3                                    # proj_dim
    H = num_heads
    E = P // H                                     # head dim
    R = H * M                                      # flattened (head, batch, variate)
    scale = 1.0 / (float(E) ** 0.5)

    x = x_ref[...].astype(f32).reshape(M, D)       # (M, D)

    # ---- fused QKV projection: one wide matmul on all rows of the step -------
    qkv = jnp.dot(x, wqkv_ref[...], preferred_element_type=f32) + bqkv_ref[...]
    q = qkv[:, :P]                                 # (M, P)
    k = qkv[:, P:2 * P]                            # (M, P)
    v = qkv[:, 2 * P:]                             # (M, P)

    # ---- head-batched attention in a flattened (H*M, ...) layout -------------
    hmask = hmask_ref[...]                         # (R, P): row's own head columns
    # q replicated per head along rows (h-major), masked to its head's columns.
    q_rep = jnp.broadcast_to(q[None], (H, M, P)).reshape(R, P) * hmask

    # scores[h*M + b*L + l, b'*L + s] — contracts the last dims directly (no k.T)
    s = jax.lax.dot_general(q_rep, k, (((1,), (1,)), ((), ())),
                            preferred_element_type=f32) * scale      # (R, M)
    s = s + smask_ref[...]                         # -1e30 on cross-batch entries

    # row-wise softmax (each row = one (head, batch, query) over that batch's keys)
    s = s - jnp.max(s, axis=-1, keepdims=True)
    p_un = jnp.exp(s)
    inv_den = pl.reciprocal(jnp.sum(p_un, axis=-1, keepdims=True))   # exact
    attn = p_un * inv_den                          # (R, M)

    # context rows, keep only the row's own head columns; cross-batch probs are 0.
    ctx_rows = jnp.dot(attn, v, preferred_element_type=f32) * hmask  # (R, P)
    # fold the H row-blocks back to (M, P): ctx[m, p] = sum_h ctx_rows[h*M + m, p]
    ctx = ctx_rows.reshape(H, M, P).sum(axis=0)                      # (M, P)

    att = jnp.dot(ctx, wo_ref[...], preferred_element_type=f32) + bo_ref[...]

    # ---- add & LayerNorm 1 ----------------------------------------------------
    z1 = x + att
    m1 = jnp.mean(z1, axis=-1, keepdims=True)
    c1 = z1 - m1
    v1 = jnp.mean(c1 * c1, axis=-1, keepdims=True)
    x1 = c1 * jax.lax.rsqrt(v1 + eps) * g1_ref[...] + be1_ref[...]

    # ---- feed-forward (pointwise 1x1 convs == per-token MLP) ------------------
    h = jnp.dot(x1, wf1_ref[...], preferred_element_type=f32) + bf1_ref[...]
    h = 0.5 * h * (1.0 + jnp.tanh(0.7978845608028654 * (h + 0.044715 * h * h * h)))
    ff = jnp.dot(h, wf2_ref[...], preferred_element_type=f32) + bf2_ref[...]

    # ---- add & LayerNorm 2 ----------------------------------------------------
    z2 = x1 + ff
    m2 = jnp.mean(z2, axis=-1, keepdims=True)
    c2 = z2 - m2
    v2 = jnp.mean(c2 * c2, axis=-1, keepdims=True)
    out = c2 * jax.lax.rsqrt(v2 + eps) * g2_ref[...] + be2_ref[...]

    o_ref[...] = out.reshape(Bblk, L, D).astype(o_ref.dtype)


# ----------------------------------------------------------------------------
# Host-side constant masks (hoisted off the kernel critical path)
# ----------------------------------------------------------------------------
def _make_masks(Bblk, N, H, P):
    E = P // H
    M = Bblk * N
    R = H * M
    r = np.arange(R)
    rh = r // M                       # head of flattened row
    rb = (r % M) // N                 # batch of flattened row
    col_head = np.arange(P) // E
    head_mask = (rh[:, None] == col_head[None, :]).astype(np.float32)      # (R, P)
    kb = np.arange(M) // N            # batch of key row
    score_mask = np.where(rb[:, None] == kb[None, :], 0.0, -1e30).astype(np.float32)
    return jnp.asarray(head_mask), jnp.asarray(score_mask)                 # (R, M)


def _default_grid_steps(B):
    """1 step on single-TC chips (v5e/v6e); 2-way parallel split on v7x."""
    kind = ""
    try:
        kind = jax.devices()[0].device_kind.lower()
    except Exception:
        pass
    if "v7" in kind and B % 2 == 0:
        return 2
    return 1


# ----------------------------------------------------------------------------
# Wrapper
# ----------------------------------------------------------------------------
def trm_block(x, params, *, num_heads=8, eps=1e-5, grid_steps=None):
    """x: (B, N, D) -> (B, N, D). Mirrors TrmBlock.forward (eval mode)."""
    B, N, D = x.shape
    p = params
    P3 = p["w_qkv"].shape[1]
    P = P3 // 3
    hidden = p["w_ff1"].shape[1]

    if grid_steps is None:
        grid_steps = _default_grid_steps(B)
    assert B % grid_steps == 0, "grid_steps must divide batch"
    Bblk = B // grid_steps

    head_mask, score_mask = _make_masks(Bblk, N, num_heads, P)

    def rep(shape):                     # full-array spec, constant across grid
        n = len(shape)
        return pl.BlockSpec(shape, lambda b, n=n: (0,) * n)

    kernel = functools.partial(_trm_block_kernel, num_heads=num_heads, eps=eps)
    return pl.pallas_call(
        kernel,
        out_shape=jax.ShapeDtypeStruct((B, N, D), x.dtype),
        grid=(grid_steps,),
        in_specs=[
            pl.BlockSpec((Bblk, N, D), lambda b: (b, 0, 0)),
            rep(head_mask.shape), rep(score_mask.shape),
            rep((D, P3)), rep((1, P3)),
            rep((P, D)), rep((1, D)),
            rep((1, D)), rep((1, D)),
            rep((D, hidden)), rep((1, hidden)),
            rep((hidden, D)), rep((1, D)),
            rep((1, D)), rep((1, D)),
        ],
        out_specs=pl.BlockSpec((Bblk, N, D), lambda b: (b, 0, 0)),
        compiler_params=pltpu.CompilerParams(dimension_semantics=("parallel",)),
    )(x, head_mask, score_mask,
      p["w_qkv"], p["b_qkv"], p["w_o"], p["b_o"],
      p["ln1_gamma"], p["ln1_beta"],
      p["w_ff1"], p["b_ff1"], p["w_ff2"], p["b_ff2"],
      p["ln2_gamma"], p["ln2_beta"])


# ----------------------------------------------------------------------------
# Pure-JAX reference (same math) for a correctness check
# ----------------------------------------------------------------------------
def _reference(x, p, num_heads=8, eps=1e-5):
    B, N, D = x.shape
    P = p["w_qkv"].shape[1] // 3
    H = num_heads
    E = P // H
    qkv = x @ p["w_qkv"] + p["b_qkv"]
    q, k, v = qkv[..., :P], qkv[..., P:2 * P], qkv[..., 2 * P:]
    q = q.reshape(B, N, H, E)
    k = k.reshape(B, N, H, E)
    v = v.reshape(B, N, H, E)
    scale = 1.0 / (float(E) ** 0.5)
    scores = jnp.einsum('blhe,bshe->bhls', q, k)
    A = jax.nn.softmax(scale * scores, axis=-1)
    ctx = jnp.einsum('bhls,bshd->blhd', A, v).reshape(B, N, P)
    att = ctx @ p["w_o"] + p["b_o"]

    def ln(z, g, b):
        m = z.mean(-1, keepdims=True)
        var = ((z - m) ** 2).mean(-1, keepdims=True)
        return (z - m) * jax.lax.rsqrt(var + eps) * g + b

    x1 = ln(x + att, p["ln1_gamma"], p["ln1_beta"])
    h = x1 @ p["w_ff1"] + p["b_ff1"]
    h = 0.5 * h * (1.0 + jnp.tanh(0.7978845608028654 * (h + 0.044715 * h ** 3)))
    ff = h @ p["w_ff2"] + p["b_ff2"]
    return ln(x1 + ff, p["ln2_gamma"], p["ln2_beta"])


# ----------------------------------------------------------------------------
# Deterministic parameter init (torch-style uniform(+-1/sqrt(fan_in)))
# ----------------------------------------------------------------------------
def init_params(key, D, proj_dim):
    ks = jax.random.split(key, 8)
    u = lambda k, shape, b: jax.random.uniform(k, shape, jnp.float32, -b, b)
    bd = 1.0 / float(D) ** 0.5
    bp = 1.0 / float(proj_dim) ** 0.5
    hidden = 4 * D
    bh = 1.0 / float(hidden) ** 0.5
    return dict(
        w_qkv=u(ks[0], (D, 3 * proj_dim), bd), b_qkv=u(ks[1], (1, 3 * proj_dim), bd),
        w_o=u(ks[2], (proj_dim, D), bp), b_o=u(ks[3], (1, D), bp),
        ln1_gamma=jnp.ones((1, D), jnp.float32), ln1_beta=jnp.zeros((1, D), jnp.float32),
        w_ff1=u(ks[4], (D, hidden), bd), b_ff1=u(ks[5], (1, hidden), bd),
        w_ff2=u(ks[6], (hidden, D), bh), b_ff2=u(ks[7], (1, D), bh),
        ln2_gamma=jnp.ones((1, D), jnp.float32), ln2_beta=jnp.zeros((1, D), jnp.float32),
    )


# ----------------------------------------------------------------------------
# Main
# ----------------------------------------------------------------------------
if __name__ == "__main__":
    B, N, D, proj_dim = 2, 8, 32, 32   # H=8 heads -> head_dim = 4

    key = jax.random.PRNGKey(0)
    kx, kp = jax.random.split(key)
    x = jax.random.normal(kx, (B, N, D), jnp.float32)
    params = init_params(kp, D, proj_dim)

    out = jax.block_until_ready(jax.jit(trm_block)(x, params))
    assert out.shape == (B, N, D)
    assert bool(jnp.all(jnp.isfinite(out)))

    ref = jax.block_until_ready(jax.jit(_reference)(x, params))
    assert float(jnp.max(jnp.abs(out - ref))) < 1e-3   # exact reciprocal -> tight

    print("KERNEL_OK")
</pallas_src>

<mosaic_0001>
module attributes {stable_mosaic.version = 11 : i64} {
  func.func @_trm_block_kernel(%arg0: i32, %arg1: memref<2x8x32xf32, #tpu.memory_space<vmem>>, %arg2: memref<128x32xf32, #tpu.memory_space<vmem>>, %arg3: memref<128x16xf32, #tpu.memory_space<vmem>>, %arg4: memref<32x96xf32, #tpu.memory_space<vmem>>, %arg5: memref<1x96xf32, #tpu.memory_space<vmem>>, %arg6: memref<32x32xf32, #tpu.memory_space<vmem>>, %arg7: memref<1x32xf32, #tpu.memory_space<vmem>>, %arg8: memref<1x32xf32, #tpu.memory_space<vmem>>, %arg9: memref<1x32xf32, #tpu.memory_space<vmem>>, %arg10: memref<32x128xf32, #tpu.memory_space<vmem>>, %arg11: memref<1x128xf32, #tpu.memory_space<vmem>>, %arg12: memref<128x32xf32, #tpu.memory_space<vmem>>, %arg13: memref<1x32xf32, #tpu.memory_space<vmem>>, %arg14: memref<1x32xf32, #tpu.memory_space<vmem>>, %arg15: memref<1x32xf32, #tpu.memory_space<vmem>>, %arg16: memref<2x8x32xf32, #tpu.memory_space<vmem>>) attributes {dimension_semantics = [#tpu.dimension_semantics<parallel>], iteration_bounds = array<i64: 1>, scalar_prefetch = 0 : i64, scratch_operands = 0 : i64, tpu.core_type = #tpu.core_type<tc>, window_params = [{transform_indices = @transform_0, window_bounds = array<i64: 2, 8, 32>}, {pipeline_mode = #tpu.pipeline_mode<synchronous>, transform_indices = @transform_1, window_bounds = array<i64: 128, 32>}, {pipeline_mode = #tpu.pipeline_mode<synchronous>, transform_indices = @transform_2, window_bounds = array<i64: 128, 16>}, {pipeline_mode = #tpu.pipeline_mode<synchronous>, transform_indices = @transform_3, window_bounds = array<i64: 32, 96>}, {pipeline_mode = #tpu.pipeline_mode<synchronous>, transform_indices = @transform_4, window_bounds = array<i64: 1, 96>}, {pipeline_mode = #tpu.pipeline_mode<synchronous>, transform_indices = @transform_5, window_bounds = array<i64: 32, 32>}, {pipeline_mode = #tpu.pipeline_mode<synchronous>, transform_indices = @transform_6, window_bounds = array<i64: 1, 32>}, {pipeline_mode = #tpu.pipeline_mode<synchronous>, transform_indices = @transform_7, window_bounds = array<i64: 1, 32>}, {pipeline_mode = #tpu.pipeline_mode<synchronous>, transform_indices = @transform_8, window_bounds = array<i64: 1, 32>}, {pipeline_mode = #tpu.pipeline_mode<synchronous>, transform_indices = @transform_9, window_bounds = array<i64: 32, 128>}, {pipeline_mode = #tpu.pipeline_mode<synchronous>, transform_indices = @transform_10, window_bounds = array<i64: 1, 128>}, {pipeline_mode = #tpu.pipeline_mode<synchronous>, transform_indices = @transform_11, window_bounds = array<i64: 128, 32>}, {pipeline_mode = #tpu.pipeline_mode<synchronous>, transform_indices = @transform_12, window_bounds = array<i64: 1, 32>}, {pipeline_mode = #tpu.pipeline_mode<synchronous>, transform_indices = @transform_13, window_bounds = array<i64: 1, 32>}, {pipeline_mode = #tpu.pipeline_mode<synchronous>, transform_indices = @transform_14, window_bounds = array<i64: 1, 32>}, {transform_indices = @transform_15, window_bounds = array<i64: 2, 8, 32>}]} {
    %c0 = arith.constant 0 : index
    %c0_0 = arith.constant 0 : index
    %c0_1 = arith.constant 0 : index
    %0 = vector.load %arg1[%c0, %c0_0, %c0_1] : memref<2x8x32xf32, #tpu.memory_space<vmem>>, vector<2x8x32xf32>
    %1 = vector.shape_cast %0 : vector<2x8x32xf32> to vector<16x32xf32>
    %c0_2 = arith.constant 0 : index
    %c0_3 = arith.constant 0 : index
    %2 = vector.load %arg4[%c0_2, %c0_3] : memref<32x96xf32, #tpu.memory_space<vmem>>, vector<32x96xf32>
    %cst = arith.constant dense<0.000000e+00> : vector<16x96xf32>
    %3 = tpu.matmul %1, %2, %cst {dimension_numbers = #tpu.dot_dimension_numbers<[1], [0], [0], [1], [0, 0, 1, 1], [], []>} : vector<16x32xf32>, vector<32x96xf32>, vector<16x96xf32> -> vector<16x96xf32>
    %c0_4 = arith.constant 0 : index
    %c0_5 = arith.constant 0 : index
    %4 = vector.load %arg5[%c0_4, %c0_5] : memref<1x96xf32, #tpu.memory_space<vmem>>, vector<1x96xf32>
    %5 = vector.broadcast %4 : vector<1x96xf32> to vector<16x96xf32>
    %6 = arith.addf %3, %5 : vector<16x96xf32>
    %7 = vector.extract_strided_slice %6 {offsets = [0, 0], sizes = [16, 32], strides = [1, 1]} : vector<16x96xf32> to vector<16x32xf32>
    %8 = vector.extract_strided_slice %6 {offsets = [0, 32], sizes = [16, 32], strides = [1, 1]} : vector<16x96xf32> to vector<16x32xf32>
    %9 = vector.extract_strided_slice %6 {offsets = [0, 64], sizes = [16, 32], strides = [1, 1]} : vector<16x96xf32> to vector<16x32xf32>
    %c0_6 = arith.constant 0 : index
    %c0_7 = arith.constant 0 : index
    %10 = vector.load %arg2[%c0_6, %c0_7] : memref<128x32xf32, #tpu.memory_space<vmem>>, vector<128x32xf32>
    %11 = vector.shape_cast %7 : vector<16x32xf32> to vector<1x16x32xf32>
    %12 = vector.shape_cast %11 : vector<1x16x32xf32> to vector<1x16x32xf32>
    %13 = vector.broadcast %12 : vector<1x16x32xf32> to vector<8x16x32xf32>
    %14 = vector.shape_cast %13 : vector<8x16x32xf32> to vector<128x32xf32>
    %15 = arith.mulf %14, %10 : vector<128x32xf32>
    %cst_8 = arith.constant dense<0.000000e+00> : vector<128x16xf32>
    %16 = tpu.matmul %15, %8, %cst_8 {dimension_numbers = #tpu.dot_dimension_numbers<[1], [1], [0], [0], [0, 0, 1, 0], [], []>} : vector<128x32xf32>, vector<16x32xf32>, vector<128x16xf32> -> vector<128x16xf32>
    %cst_9 = arith.constant 5.000000e-01 : f32
    %17 = vector.broadcast %cst_9 : f32 to vector<128x16xf32>
    %18 = arith.mulf %16, %17 : vector<128x16xf32>
    %c0_10 = arith.constant 0 : index
    %c0_11 = arith.constant 0 : index
    %19 = vector.load %arg3[%c0_10, %c0_11] : memref<128x16xf32, #tpu.memory_space<vmem>>, vector<128x16xf32>
    %20 = arith.addf %18, %19 : vector<128x16xf32>
    %cst_12 = arith.constant dense<0xFF800000> : vector<128xf32>
    %21 = vector.multi_reduction <maximumf>, %20, %cst_12 [1] : vector<128x16xf32> to vector<128xf32>
    %22 = vector.shape_cast %21 : vector<128xf32> to vector<128x1xf32>
    %23 = vector.broadcast %22 : vector<128x1xf32> to vector<128x16xf32>
    %24 = arith.subf %20, %23 : vector<128x16xf32>
    %25 = math.exp %24 : vector<128x16xf32>
    %cst_13 = arith.constant dense<0.000000e+00> : vector<128xf32>
    %26 = vector.multi_reduction <add>, %25, %cst_13 [1] : vector<128x16xf32> to vector<128xf32>
    %27 = vector.shape_cast %26 : vector<128xf32> to vector<128x1xf32>
    %28 = tpu.reciprocal %27 : vector<128x1xf32> -> vector<128x1xf32>
    %29 = vector.broadcast %28 : vector<128x1xf32> to vector<128x16xf32>
    %30 = arith.mulf %25, %29 : vector<128x16xf32>
    %cst_14 = arith.constant dense<0.000000e+00> : vector<128x32xf32>
    %31 = tpu.matmul %30, %9, %cst_14 {dimension_numbers = #tpu.dot_dimension_numbers<[1], [0], [0], [1], [0, 0, 1, 1], [], []>} : vector<128x16xf32>, vector<16x32xf32>, vector<128x32xf32> -> vector<128x32xf32>
    %32 = arith.mulf %31, %10 : vector<128x32xf32>
    %33 = vector.shape_cast %32 : vector<128x32xf32> to vector<8x16x32xf32>
    %cst_15 = arith.constant dense<0.000000e+00> : vector<16x32xf32>
    %34 = vector.multi_reduction <add>, %33, %cst_15 [0] : vector<8x16x32xf32> to vector<16x32xf32>
    %c0_16 = arith.constant 0 : index
    %c0_17 = arith.constant 0 : index
    %35 = vector.load %arg6[%c0_16, %c0_17] : memref<32x32xf32, #tpu.memory_space<vmem>>, vector<32x32xf32>
    %cst_18 = arith.constant dense<0.000000e+00> : vector<16x32xf32>
    %36 = tpu.matmul %34, %35, %cst_18 {dimension_numbers = #tpu.dot_dimension_numbers<[1], [0], [0], [1], [0, 0, 1, 1], [], []>} : vector<16x32xf32>, vector<32x32xf32>, vector<16x32xf32> -> vector<16x32xf32>
    %c0_19 = arith.constant 0 : index
    %c0_20 = arith.constant 0 : index
    %37 = vector.load %arg7[%c0_19, %c0_20] : memref<1x32xf32, #tpu.memory_space<vmem>>, vector<1x32xf32>
    %38 = vector.broadcast %37 : vector<1x32xf32> to vector<16x32xf32>
    %39 = arith.addf %36, %38 : vector<16x32xf32>
    %40 = arith.addf %1, %39 : vector<16x32xf32>
    %cst_21 = arith.constant dense<0.000000e+00> : vector<16xf32>
    %41 = vector.multi_reduction <add>, %40, %cst_21 [1] : vector<16x32xf32> to vector<16xf32>
    %42 = vector.shape_cast %41 : vector<16xf32> to vector<16x1xf32>
    %cst_22 = arith.constant 3.200000e+01 : f32
    %43 = vector.broadcast %cst_22 : f32 to vector<16x1xf32>
    %44 = arith.divf %42, %43 : vector<16x1xf32>
    %45 = vector.broadcast %44 : vector<16x1xf32> to vector<16x32xf32>
    %46 = arith.subf %40, %45 : vector<16x32xf32>
    %47 = arith.mulf %46, %46 : vector<16x32xf32>
    %cst_23 = arith.constant dense<0.000000e+00> : vector<16xf32>
    %48 = vector.multi_reduction <add>, %47, %cst_23 [1] : vector<16x32xf32> to vector<16xf32>
    %49 = vector.shape_cast %48 : vector<16xf32> to vector<16x1xf32>
    %cst_24 = arith.constant 3.200000e+01 : f32
    %50 = vector.broadcast %cst_24 : f32 to vector<16x1xf32>
    %51 = arith.divf %49, %50 : vector<16x1xf32>
    %cst_25 = arith.constant 9.99999974E-6 : f32
    %52 = vector.broadcast %cst_25 : f32 to vector<16x1xf32>
    %53 = arith.addf %51, %52 : vector<16x1xf32>
    %54 = math.rsqrt %53 : vector<16x1xf32>
    %55 = vector.broadcast %54 : vector<16x1xf32> to vector<16x32xf32>
    %56 = arith.mulf %46, %55 : vector<16x32xf32>
    %c0_26 = arith.constant 0 : index
    %c0_27 = arith.constant 0 : index
    %57 = vector.load %arg8[%c0_26, %c0_27] : memref<1x32xf32, #tpu.memory_space<vmem>>, vector<1x32xf32>
    %58 = vector.broadcast %57 : vector<1x32xf32> to vector<16x32xf32>
    %59 = arith.mulf %56, %58 : vector<16x32xf32>
    %c0_28 = arith.constant 0 : index
    %c0_29 = arith.constant 0 : index
    %60 = vector.load %arg9[%c0_28, %c0_29] : memref<1x32xf32, #tpu.memory_space<vmem>>, vector<1x32xf32>
    %61 = vector.broadcast %60 : vector<1x32xf32> to vector<16x32xf32>
    %62 = arith.addf %59, %61 : vector<16x32xf32>
    %c0_30 = arith.constant 0 : index
    %c0_31 = arith.constant 0 : index
    %63 = vector.load %arg10[%c0_30, %c0_31] : memref<32x128xf32, #tpu.memory_space<vmem>>, vector<32x128xf32>
    %cst_32 = arith.constant dense<0.000000e+00> : vector<16x128xf32>
    %64 = tpu.matmul %62, %63, %cst_32 {dimension_numbers = #tpu.dot_dimension_numbers<[1], [0], [0], [1], [0, 0, 1, 1], [], []>} : vector<16x32xf32>, vector<32x128xf32>, vector<16x128xf32> -> vector<16x128xf32>
    %c0_33 = arith.constant 0 : index
    %c0_34 = arith.constant 0 : index
    %65 = vector.load %arg11[%c0_33, %c0_34] : memref<1x128xf32, #tpu.memory_space<vmem>>, vector<1x128xf32>
    %66 = vector.broadcast %65 : vector<1x128xf32> to vector<16x128xf32>
    %67 = arith.addf %64, %66 : vector<16x128xf32>
    %cst_35 = arith.constant 5.000000e-01 : f32
    %68 = vector.broadcast %cst_35 : f32 to vector<16x128xf32>
    %69 = arith.mulf %68, %67 : vector<16x128xf32>
    %cst_36 = arith.constant 4.471500e-02 : f32
    %70 = vector.broadcast %cst_36 : f32 to vector<16x128xf32>
    %71 = arith.mulf %70, %67 : vector<16x128xf32>
    %72 = arith.mulf %71, %67 : vector<16x128xf32>
    %73 = arith.mulf %72, %67 : vector<16x128xf32>
    %74 = arith.addf %67, %73 : vector<16x128xf32>
    %cst_37 = arith.constant 0.797884583 : f32
    %75 = vector.broadcast %cst_37 : f32 to vector<16x128xf32>
    %76 = arith.mulf %75, %74 : vector<16x128xf32>
    %77 = math.tanh %76 : vector<16x128xf32>
    %cst_38 = arith.constant 1.000000e+00 : f32
    %78 = vector.broadcast %cst_38 : f32 to vector<16x128xf32>
    %79 = arith.addf %78, %77 : vector<16x128xf32>
    %80 = arith.mulf %69, %79 : vector<16x128xf32>
    %c0_39 = arith.constant 0 : index
    %c0_40 = arith.constant 0 : index
    %81 = vector.load %arg12[%c0_39, %c0_40] : memref<128x32xf32, #tpu.memory_space<vmem>>, vector<128x32xf32>
    %cst_41 = arith.constant dense<0.000000e+00> : vector<16x32xf32>
    %82 = tpu.matmul %80, %81, %cst_41 {dimension_numbers = #tpu.dot_dimension_numbers<[1], [0], [0], [1], [0, 0, 1, 1], [], []>} : vector<16x128xf32>, vector<128x32xf32>, vector<16x32xf32> -> vector<16x32xf32>
    %c0_42 = arith.constant 0 : index
    %c0_43 = arith.constant 0 : index
    %83 = vector.load %arg13[%c0_42, %c0_43] : memref<1x32xf32, #tpu.memory_space<vmem>>, vector<1x32xf32>
    %84 = vector.broadcast %83 : vector<1x32xf32> to vector<16x32xf32>
    %85 = arith.addf %82, %84 : vector<16x32xf32>
    %86 = arith.addf %62, %85 : vector<16x32xf32>
    %cst_44 = arith.constant dense<0.000000e+00> : vector<16xf32>
    %87 = vector.multi_reduction <add>, %86, %cst_44 [1] : vector<16x32xf32> to vector<16xf32>
    %88 = vector.shape_cast %87 : vector<16xf32> to vector<16x1xf32>
    %cst_45 = arith.constant 3.200000e+01 : f32
    %89 = vector.broadcast %cst_45 : f32 to vector<16x1xf32>
    %90 = arith.divf %88, %89 : vector<16x1xf32>
    %91 = vector.broadcast %90 : vector<16x1xf32> to vector<16x32xf32>
    %92 = arith.subf %86, %91 : vector<16x32xf32>
    %93 = arith.mulf %92, %92 : vector<16x32xf32>
    %cst_46 = arith.constant dense<0.000000e+00> : vector<16xf32>
    %94 = vector.multi_reduction <add>, %93, %cst_46 [1] : vector<16x32xf32> to vector<16xf32>
    %95 = vector.shape_cast %94 : vector<16xf32> to vector<16x1xf32>
    %cst_47 = arith.constant 3.200000e+01 : f32
    %96 = vector.broadcast %cst_47 : f32 to vector<16x1xf32>
    %97 = arith.divf %95, %96 : vector<16x1xf32>
    %cst_48 = arith.constant 9.99999974E-6 : f32
    %98 = vector.broadcast %cst_48 : f32 to vector<16x1xf32>
    %99 = arith.addf %97, %98 : vector<16x1xf32>
    %100 = math.rsqrt %99 : vector<16x1xf32>
    %101 = vector.broadcast %100 : vector<16x1xf32> to vector<16x32xf32>
    %102 = arith.mulf %92, %101 : vector<16x32xf32>
    %c0_49 = arith.constant 0 : index
    %c0_50 = arith.constant 0 : index
    %103 = vector.load %arg14[%c0_49, %c0_50] : memref<1x32xf32, #tpu.memory_space<vmem>>, vector<1x32xf32>
    %104 = vector.broadcast %103 : vector<1x32xf32> to vector<16x32xf32>
    %105 = arith.mulf %102, %104 : vector<16x32xf32>
    %c0_51 = arith.constant 0 : index
    %c0_52 = arith.constant 0 : index
    %106 = vector.load %arg15[%c0_51, %c0_52] : memref<1x32xf32, #tpu.memory_space<vmem>>, vector<1x32xf32>
    %107 = vector.broadcast %106 : vector<1x32xf32> to vector<16x32xf32>
    %108 = arith.addf %105, %107 : vector<16x32xf32>
    %109 = vector.shape_cast %108 : vector<16x32xf32> to vector<2x8x32xf32>
    %c0_53 = arith.constant 0 : index
    %c0_54 = arith.constant 0 : index
    %c0_55 = arith.constant 0 : index
    %110 = vector.load %arg16[%c0_53, %c0_54, %c0_55] : memref<2x8x32xf32, #tpu.memory_space<vmem>>, vector<2x8x32xf32>
    tpu.vector_store %arg16[%c0_53, %c0_54, %c0_55], %109 {strides = array<i32>} : memref<2x8x32xf32, #tpu.memory_space<vmem>>, vector<2x8x32xf32>,
    return
  }
  func.func @transform_0(%arg0: i32) -> (i32, i32, i32) {
    %c0_i32 = arith.constant 0 : i32
    %c0_i32_0 = arith.constant 0 : i32
    %c0_i32_1 = arith.constant 0 : i32
    return %arg0, %c0_i32, %c0_i32_0 : i32, i32, i32
  }
  func.func @transform_1(%arg0: i32) -> (i32, i32) {
    %c0_i32 = arith.constant 0 : i32
    %c0_i32_0 = arith.constant 0 : i32
    %c0_i32_1 = arith.constant 0 : i32
    return %c0_i32, %c0_i32_0 : i32, i32
  }
  func.func @transform_2(%arg0: i32) -> (i32, i32) {
    %c0_i32 = arith.constant 0 : i32
    %c0_i32_0 = arith.constant 0 : i32
    %c0_i32_1 = arith.constant 0 : i32
    return %c0_i32, %c0_i32_0 : i32, i32
  }
  func.func @transform_3(%arg0: i32) -> (i32, i32) {
    %c0_i32 = arith.constant 0 : i32
    %c0_i32_0 = arith.constant 0 : i32
    %c0_i32_1 = arith.constant 0 : i32
    return %c0_i32, %c0_i32_0 : i32, i32
  }
  func.func @transform_4(%arg0: i32) -> (i32, i32) {
    %c0_i32 = arith.constant 0 : i32
    %c0_i32_0 = arith.constant 0 : i32
    %c0_i32_1 = arith.constant 0 : i32
    return %c0_i32, %c0_i32_0 : i32, i32
  }
  func.func @transform_5(%arg0: i32) -> (i32, i32) {
    %c0_i32 = arith.constant 0 : i32
    %c0_i32_0 = arith.constant 0 : i32
    %c0_i32_1 = arith.constant 0 : i32
    return %c0_i32, %c0_i32_0 : i32, i32
  }
  func.func @transform_6(%arg0: i32) -> (i32, i32) {
    %c0_i32 = arith.constant 0 : i32
    %c0_i32_0 = arith.constant 0 : i32
    %c0_i32_1 = arith.constant 0 : i32
    return %c0_i32, %c0_i32_0 : i32, i32
  }
  func.func @transform_7(%arg0: i32) -> (i32, i32) {
    %c0_i32 = arith.constant 0 : i32
    %c0_i32_0 = arith.constant 0 : i32
    %c0_i32_1 = arith.constant 0 : i32
    return %c0_i32, %c0_i32_0 : i32, i32
  }
  func.func @transform_8(%arg0: i32) -> (i32, i32) {
    %c0_i32 = arith.constant 0 : i32
    %c0_i32_0 = arith.constant 0 : i32
    %c0_i32_1 = arith.constant 0 : i32
    return %c0_i32, %c0_i32_0 : i32, i32
  }
  func.func @transform_9(%arg0: i32) -> (i32, i32) {
    %c0_i32 = arith.constant 0 : i32
    %c0_i32_0 = arith.constant 0 : i32
    %c0_i32_1 = arith.constant 0 : i32
    return %c0_i32, %c0_i32_0 : i32, i32
  }
  func.func @transform_10(%arg0: i32) -> (i32, i32) {
    %c0_i32 = arith.constant 0 : i32
    %c0_i32_0 = arith.constant 0 : i32
    %c0_i32_1 = arith.constant 0 : i32
    return %c0_i32, %c0_i32_0 : i32, i32
  }
  func.func @transform_11(%arg0: i32) -> (i32, i32) {
    %c0_i32 = arith.constant 0 : i32
    %c0_i32_0 = arith.constant 0 : i32
    %c0_i32_1 = arith.constant 0 : i32
    return %c0_i32, %c0_i32_0 : i32, i32
  }
  func.func @transform_12(%arg0: i32) -> (i32, i32) {
    %c0_i32 = arith.constant 0 : i32
    %c0_i32_0 = arith.constant 0 : i32
    %c0_i32_1 = arith.constant 0 : i32
    return %c0_i32, %c0_i32_0 : i32, i32
  }
  func.func @transform_13(%arg0: i32) -> (i32, i32) {
    %c0_i32 = arith.constant 0 : i32
    %c0_i32_0 = arith.constant 0 : i32
    %c0_i32_1 = arith.constant 0 : i32
    return %c0_i32, %c0_i32_0 : i32, i32
  }
  func.func @transform_14(%arg0: i32) -> (i32, i32) {
    %c0_i32 = arith.constant 0 : i32
    %c0_i32_0 = arith.constant 0 : i32
    %c0_i32_1 = arith.constant 0 : i32
    return %c0_i32, %c0_i32_0 : i32, i32
  }
  func.func @transform_15(%arg0: i32) -> (i32, i32, i32) {
    %c0_i32 = arith.constant 0 : i32
    %c0_i32_0 = arith.constant 0 : i32
    %c0_i32_1 = arith.constant 0 : i32
    return %arg0, %c0_i32, %c0_i32_0 : i32, i32, i32
  }
}

</mosaic_0001>

<llo_original>
// kernel: trm_block.1
$region0: #{trm_block.1}
  #allocation0 [shape = 'u32[]', space=smem, size = 0x4, offset = 0x4, fixed_abs, tag = 'smem constant byte address 0x4 - core index']
  #allocation1 [shape = 'u32[144,128]{1,0:T(1,128)}', space=vmem, size = 0x12000, scoped, tag = 'internal scratch']
  %s0 = inlined_call_operand.vmem [shape: f32[2,8,32], index: 0, kind: input, shape index: {}]
  %s1 = inlined_call_operand.hbm [shape: f32[128,32], index: 1, kind: input, shape index: {}]
  %s2 = inlined_call_operand.vmem [shape: f32[128,16], index: 2, kind: input, shape index: {}]
  %s3 = inlined_call_operand.vmem [shape: f32[32,96], index: 3, kind: input, shape index: {}]
  %s4 = inlined_call_operand.vmem [shape: f32[1,96], index: 4, kind: input, shape index: {}]
  %s5 = inlined_call_operand.vmem [shape: f32[32,32], index: 5, kind: input, shape index: {}]
  %s6 = inlined_call_operand.vmem [shape: f32[1,32], index: 6, kind: input, shape index: {}]
  %s7 = inlined_call_operand.vmem [shape: f32[1,32], index: 7, kind: input, shape index: {}]
  %s8 = inlined_call_operand.vmem [shape: f32[1,32], index: 8, kind: input, shape index: {}]
  %s9 = inlined_call_operand.hbm [shape: f32[32,128], index: 9, kind: input, shape index: {}]
  %s10 = inlined_call_operand.vmem [shape: f32[1,128], index: 10, kind: input, shape index: {}]
  %s11 = inlined_call_operand.vmem [shape: f32[128,32], index: 11, kind: input, shape index: {}]
  %s12 = inlined_call_operand.hbm [shape: f32[1,32], index: 12, kind: input, shape index: {}]
  %s13 = inlined_call_operand.hbm [shape: f32[1,32], index: 13, kind: input, shape index: {}]
  %s14 = inlined_call_operand.hbm [shape: f32[1,32], index: 14, kind: input, shape index: {}]
  %s15 = inlined_call_operand.hbm [shape: f32[2,8,32], index: 15, kind: output, shape index: {}]
  %s16 = sld [smem:[#allocation0]]
  $region90: #{trm_block.1} parent=0
    _
  %s18 = ssub.s32 1, %s16
  %s19 = scalar_select 0, %s18, %s16
  $region1: #{trm_block.1} parent=0
    #allocation2 [shape = 'u8[65536]{0}', space=vmem, size = 0x10000, scoped, tag = 'input window, operand 1, single buffered']
    #allocation3 [shape = 's32[1]{0}', space=sflag, size = 0x4, scoped, tag = 'scoped memory for trm_block.1']
    #allocation4 [shape = 's32[1]{0}', space=sflag, size = 0x4, scoped, tag = 'scoped memory for trm_block.1']
    #allocation5 [shape = 'u8[16384]{0}', space=vmem, size = 0x4000, scoped, tag = 'input window, operand 9, single buffered']
    #allocation6 [shape = 's32[1]{0}', space=sflag, size = 0x4, scoped, tag = 'scoped memory for trm_block.1']
    #allocation7 [shape = 'u8[512]{0}', space=vmem, size = 0x400, scoped, tag = 'input window, operand 12, single buffered']
    #allocation8 [shape = 'u8[512]{0}', space=vmem, size = 0x400, scoped, tag = 'input window, operand 13, single buffered']
    #allocation9 [shape = 's32[1]{0}', space=sflag, size = 0x4, scoped, tag = 'scoped memory for trm_block.1']
    #allocation10 [shape = 'u8[512]{0}', space=vmem, size = 0x400, scoped, tag = 'input window, operand 14, single buffered']
    #allocation11 [shape = 'u8[8192]{0}', space=vmem, size = 0x2000, scoped, tag = 'output window, operand 0, single buffered']
    %20 = vsyncpa [#allocation3], 0
    %21 = vsyncpa [#allocation6], 0
    %22 = vsyncpa [#allocation9], 0
    %23 = vsyncpa [#allocation4], 0
    // Predicated region
    $region2: #{trm_block.1} parent=1 // pred_check
      _
    $region3: #{trm_block.1} parent=1 // pred_check_branch
      %25 = sbr.rel (0) target = $region5
    $region4: #{trm_block.1} parent=1 // pred_region
      _
    $region5: #{trm_block.1} parent=1 // pred_fallthru
      _
    // Predicated region
    $region6: #{trm_block.1} parent=1 // pred_check
      _
    $region7: #{trm_block.1} parent=1 // pred_check_branch
      %27 = sbr.rel (0) target = $region9
    $region8: #{trm_block.1} parent=1 // pred_region
      %s29 = ssub.s32 2048, 2048
      %30 = vsyncadd [#allocation3], %s29
      %s31 = sshll.u32 [#allocation2], 4
      %s32 = int_to_ptr.vmem [resolvable:$true] %s31
      %37 = dma.hbm_to_vmem [thread:$0]  %s1, 2048, %s32, [#allocation3], 128, 128, 8
    $region9: #{trm_block.1} parent=1 // pred_fallthru
      _
    // Predicated region
    $region10: #{trm_block.1} parent=1 // pred_check
      _
    $region11: #{trm_block.1} parent=1 // pred_check_branch
      %39 = sbr.rel (0) target = $region13
    $region12: #{trm_block.1} parent=1 // pred_region
      _
    $region13: #{trm_block.1} parent=1 // pred_fallthru
      _
    // Predicated region
    $region14: #{trm_block.1} parent=1 // pred_check
      _
    $region15: #{trm_block.1} parent=1 // pred_check_branch
      %41 = sbr.rel (0) target = $region17
    $region16: #{trm_block.1} parent=1 // pred_region
      _
    $region17: #{trm_block.1} parent=1 // pred_fallthru
      _
    // Predicated region
    $region18: #{trm_block.1} parent=1 // pred_check
      _
    $region19: #{trm_block.1} parent=1 // pred_check_branch
      %43 = sbr.rel (0) target = $region21
    $region20: #{trm_block.1} parent=1 // pred_region
      _
    $region21: #{trm_block.1} parent=1 // pred_fallthru
      _
    // Predicated region
    $region22: #{trm_block.1} parent=1 // pred_check
      _
    $region23: #{trm_block.1} parent=1 // pred_check_branch
      %45 = sbr.rel (0) target = $region25
    $region24: #{trm_block.1} parent=1 // pred_region
      _
    $region25: #{trm_block.1} parent=1 // pred_fallthru
      _
    // Predicated region
    $region26: #{trm_block.1} parent=1 // pred_check
      _
    $region27: #{trm_block.1} parent=1 // pred_check_branch
      %47 = sbr.rel (0) target = $region29
    $region28: #{trm_block.1} parent=1 // pred_region
      _
    $region29: #{trm_block.1} parent=1 // pred_fallthru
      _
    // Predicated region
    $region30: #{trm_block.1} parent=1 // pred_check
      _
    $region31: #{trm_block.1} parent=1 // pred_check_branch
      %49 = sbr.rel (0) target = $region33
    $region32: #{trm_block.1} parent=1 // pred_region
      _
    $region33: #{trm_block.1} parent=1 // pred_fallthru
      _
    // Predicated region
    $region34: #{trm_block.1} parent=1 // pred_check
      _
    $region35: #{trm_block.1} parent=1 // pred_check_branch
      %51 = sbr.rel (0) target = $region37
    $region36: #{trm_block.1} parent=1 // pred_region
      _
    $region37: #{trm_block.1} parent=1 // pred_fallthru
      _
    // Predicated region
    $region38: #{trm_block.1} parent=1 // pred_check
      _
    $region39: #{trm_block.1} parent=1 // pred_check_branch
      %53 = sbr.rel (0) target = $region41
    $region40: #{trm_block.1} parent=1 // pred_region
      %s55 = ssub.s32 512, 512
      %56 = vsyncadd [#allocation6], %s55
      %s57 = sshll.u32 [#allocation5], 4
      %s58 = int_to_ptr.vmem [resolvable:$true] %s57
      %63 = dma.hbm_to_vmem [thread:$0]  %s9, 512, %s58, [#allocation6], 128, 128, 8
    $region41: #{trm_block.1} parent=1 // pred_fallthru
      _
    // Predicated region
    $region42: #{trm_block.1} parent=1 // pred_check
      _
    $region43: #{trm_block.1} parent=1 // pred_check_branch
      %65 = sbr.rel (0) target = $region45
    $region44: #{trm_block.1} parent=1 // pred_region
      _
    $region45: #{trm_block.1} parent=1 // pred_fallthru
      _
    // Predicated region
    $region46: #{trm_block.1} parent=1 // pred_check
      _
    $region47: #{trm_block.1} parent=1 // pred_check_branch
      %67 = sbr.rel (0) target = $region49
    $region48: #{trm_block.1} parent=1 // pred_region
      _
    $region49: #{trm_block.1} parent=1 // pred_fallthru
      _
    // Predicated region
    $region50: #{trm_block.1} parent=1 // pred_check
      _
    $region51: #{trm_block.1} parent=1 // pred_check_branch
      %69 = sbr.rel (0) target = $region53
    $region52: #{trm_block.1} parent=1 // pred_region
      %s71 = ssub.s32 16, 16
      %72 = vsyncadd [#allocation6], %s71
      %s74 = sshll.u32 [#allocation7], 4
      %s75 = int_to_ptr.vmem [resolvable:$true] %s74
      %77 = dma.hbm_to_vmem [thread:$0]  %s12, 16, %s75, [#allocation6]
    $region53: #{trm_block.1} parent=1 // pred_fallthru
      _
    // Predicated region
    $region54: #{trm_block.1} parent=1 // pred_check
      _
    $region55: #{trm_block.1} parent=1 // pred_check_branch
      %79 = sbr.rel (0) target = $region57
    $region56: #{trm_block.1} parent=1 // pred_region
      %s81 = ssub.s32 16, 16
      %82 = vsyncadd [#allocation9], %s81
      %s84 = sshll.u32 [#allocation8], 4
      %s85 = int_to_ptr.vmem [resolvable:$true] %s84
      %87 = dma.hbm_to_vmem [thread:$0]  %s13, 16, %s85, [#allocation9]
    $region57: #{trm_block.1} parent=1 // pred_fallthru
      _
    // Predicated region
    $region58: #{trm_block.1} parent=1 // pred_check
      _
    $region59: #{trm_block.1} parent=1 // pred_check_branch
      %89 = sbr.rel (0) target = $region61
    $region60: #{trm_block.1} parent=1 // pred_region
      %s91 = ssub.s32 16, 16
      %92 = vsyncadd [#allocation9], %s91
      %s94 = sshll.u32 [#allocation10], 4
      %s95 = int_to_ptr.vmem [resolvable:$true] %s94
      %97 = dma.hbm_to_vmem [thread:$0]  %s14, 16, %s95, [#allocation9]
    $region61: #{trm_block.1} parent=1 // pred_fallthru
      _
    // Predicated region
    $region62: #{trm_block.1} parent=1 // pred_check
      _
    $region63: #{trm_block.1} parent=1 // pred_check_branch
      %99 = sbr.rel (0) target = $region65
    $region64: #{trm_block.1} parent=1 // pred_region
      %100 = dma.done [#allocation3], 2048
    $region65: #{trm_block.1} parent=1 // pred_fallthru
      _
    // Predicated region
    $region66: #{trm_block.1} parent=1 // pred_check
      _
    $region67: #{trm_block.1} parent=1 // pred_check_branch
      %102 = sbr.rel (0) target = $region69
    $region68: #{trm_block.1} parent=1 // pred_region
      %103 = dma.done [#allocation6], 512
    $region69: #{trm_block.1} parent=1 // pred_fallthru
      _
    // Predicated region
    $region70: #{trm_block.1} parent=1 // pred_check
      _
    $region71: #{trm_block.1} parent=1 // pred_check_branch
      %105 = sbr.rel (0) target = $region73
    $region72: #{trm_block.1} parent=1 // pred_region
      %106 = dma.done [#allocation6], 16
    $region73: #{trm_block.1} parent=1 // pred_fallthru
      _
    // Predicated region
    $region74: #{trm_block.1} parent=1 // pred_check
      _
    $region75: #{trm_block.1} parent=1 // pred_check_branch
      %108 = sbr.rel (0) target = $region77
    $region76: #{trm_block.1} parent=1 // pred_region
      %109 = dma.done [#allocation9], 16
    $region77: #{trm_block.1} parent=1 // pred_fallthru
      _
    // Predicated region
    $region78: #{trm_block.1} parent=1 // pred_check
      _
    $region79: #{trm_block.1} parent=1 // pred_check_branch
      %111 = sbr.rel (0) target = $region81
    $region80: #{trm_block.1} parent=1 // pred_region
      %112 = dma.done [#allocation9], 16
    $region81: #{trm_block.1} parent=1 // pred_fallthru
      _
    %v113 = vld [vmem:[%s0] sm:$0xff]
    %v114 = vld [vmem:[%s0 + $0x8] sm:$0xff]
    %v115 = vld [vmem:[%s3] sm:$0xff]
    %v116 = vld [vmem:[%s3 + $0x8] sm:$0xff]
    %v117 = vld [vmem:[%s3 + $0x10] sm:$0xff]
    %v118 = vld [vmem:[%s3 + $0x18] sm:$0xff]
    %v119 = vld [vmem:[%s4] sm:$0x1]
    %v121 = vlaneseq
    %v122 = vshrl.u32 %v121, 7
    %v123 = vsub.s32 0, %v122
    %v124 = vrot.slane %v119, %v123
    %vm126 = vcmask 261120
    %v128 = vsel %vm126, %v113, 0
    %v131 = vsel %vm126, %v114, 0
    %133 = vmatprep.subr.mxu0 0.0
    %134 = vmatpush1.msra.mxu0 %v115
    %135 = vmatprep.subr.mxu0 0.0
    %136 = vmatpush1.msra.mxu0 %v116
    %137 = vmatprep.subr.mxu0 0.0
    %138 = vmatpush1.msra.mxu0 %v117
    %139 = vmatprep.subr.mxu0 0.0
    %140 = vmatpush1.msra.mxu0 %v118
    %141 = vmatprep.subr.mxu0 0.0
    %142 = vmatpush1.msra.mxu0 0.0
    %143 = vmatprep.subr.mxu0 0.0
    %144 = vmatpush1.msra.mxu0 0.0
    %145 = vmatprep.subr.mxu0 0.0
    %146 = vmatpush1.msra.mxu0 0.0
    %147 = vmatprep.subr.mxu0 0.0
    %148 = vmatpush1.msra.mxu0 0.0
    %149 = vmatprep.subr.mxu0 0.0
    %150 = vmatpush1.msra.mxu0 0.0
    %151 = vmatprep.subr.mxu0 0.0
    %152 = vmatpush1.msra.mxu0 0.0
    %153 = vmatprep.subr.mxu0 0.0
    %154 = vmatpush1.msra.mxu0 0.0
    %155 = vmatprep.subr.mxu0 0.0
    %156 = vmatpush1.msra.mxu0 0.0
    %157 = vmatprep.subr.mxu0 0.0
    %158 = vmatpush1.msra.mxu0 0.0
    %159 = vmatprep.subr.mxu0 0.0
    %160 = vmatpush1.msra.mxu0 0.0
    %161 = vmatprep.subr.mxu0 0.0
    %162 = vmatpush1.msra.mxu0 0.0
    %163 = vmatprep.subr.mxu0 0.0
    %164 = vmatpush1.msra.mxu0 0.0
    %165 = vmatprep.subr.mxu0 0.0
    %166 = vmatpush1.msra.mxu0 0.0
    %167 = vmatprep.subr.mxu0 0.0
    %168 = vmatpush1.msra.mxu0 0.0
    %169 = vmatprep.subr.mxu0 0.0
    %170 = vmatpush1.msra.mxu0 0.0
    %171 = vmatprep.subr.mxu0 0.0
    %172 = vmatpush1.msra.mxu0 0.0
    %173 = vmatprep.subr.mxu0 0.0
    %174 = vmatpush1.msra.mxu0 0.0
    %175 = vmatprep.subr.mxu0 0.0
    %176 = vmatpush1.msra.mxu0 0.0
    %177 = vmatprep.subr.mxu0 0.0
    %178 = vmatpush1.msra.mxu0 0.0
    %179 = vmatprep.subr.mxu0 0.0
    %180 = vmatpush1.msra.mxu0 0.0
    %181 = vmatprep.subr.mxu0 0.0
    %182 = vmatpush1.msra.mxu0 0.0
    %183 = vmatprep.subr.mxu0 0.0
    %184 = vmatpush1.msra.mxu0 0.0
    %185 = vmatprep.subr.mxu0 0.0
    %186 = vmatpush1.msra.mxu0 0.0
    %187 = vmatprep.subr.mxu0 0.0
    %188 = vmatpush1.msra.mxu0 0.0
    %189 = vmatprep.subr.mxu0 0.0
    %190 = vmatpush1.msra.mxu0 0.0
    %191 = vmatprep.subr.mxu0 0.0
    %192 = vmatpush1.msra.mxu0 0.0
    %193 = vmatprep.subr.mxu0 0.0
    %194 = vmatpush1.msra.mxu0 0.0
    %195 = vmatprep.subr.mxu0 0.0
    %196 = vmatpush1.msra.mxu0 0.0
    %197 = vmatprep.mubr.f32.mxu0 0.0
    %198 = vmatmul.mubr.f32.gmra.mrb[0].mxu0 %v128
    %v199 = vpop.f32.mrb[0].mxu0
    %v200 = vadd.f32 %v124, %v199
    %v201 = vpop.f32.mrb[0].mxu0
    %202 = vmatprep.mubr.f32.mxu0 0.0
    %203 = vmatmul.mubr.f32.gmra.mrb[0].mxu0 %v131
    %v204 = vpop.f32.mrb[0].mxu0
    %v205 = vadd.f32 %v124, %v204
    %v206 = vpop.f32.mrb[0].mxu0
    %207 = vdwg.mxu0
    %v208 = vld [vmem:[#allocation2] sm:$0xff]
    %v209 = vld [vmem:[#allocation2 + $0x8] sm:$0xff]
    %v210 = vld [vmem:[#allocation2 + $0x10] sm:$0xff]
    %v211 = vld [vmem:[#allocation2 + $0x18] sm:$0xff]
    %v212 = vld [vmem:[#allocation2 + $0x20] sm:$0xff]
    %v213 = vld [vmem:[#allocation2 + $0x28] sm:$0xff]
    %v214 = vld [vmem:[#allocation2 + $0x30] sm:$0xff]
    %v215 = vld [vmem:[#allocation2 + $0x38] sm:$0xff]
    %v216 = vld [vmem:[#allocation2 + $0x40] sm:$0xff]
    %v217 = vld [vmem:[#allocation2 + $0x48] sm:$0xff]
    %v218 = vld [vmem:[#allocation2 + $0x50] sm:$0xff]
    %v219 = vld [vmem:[#allocation2 + $0x58] sm:$0xff]
    %v220 = vld [vmem:[#allocation2 + $0x60] sm:$0xff]
    %v221 = vld [vmem:[#allocation2 + $0x68] sm:$0xff]
    %v222 = vld [vmem:[#allocation2 + $0x70] sm:$0xff]
    %v223 = vld [vmem:[#allocation2 + $0x78] sm:$0xff]
    %v224 = vmul.f32 %v200, %v208
    %v225 = vmul.f32 %v205, %v209
    %v226 = vmul.f32 %v200, %v210
    %v227 = vmul.f32 %v205, %v211
    %v228 = vmul.f32 %v200, %v212
    %v229 = vmul.f32 %v205, %v213
    %v230 = vmul.f32 %v200, %v214
    %v231 = vmul.f32 %v205, %v215
    %v232 = vmul.f32 %v200, %v216
    %v233 = vmul.f32 %v205, %v217
    %v234 = vmul.f32 %v200, %v218
    %v235 = vmul.f32 %v205, %v219
    %v236 = vmul.f32 %v200, %v220
    %v237 = vmul.f32 %v205, %v221
    %v238 = vmul.f32 %v200, %v222
    %v239 = vmul.f32 %v205, %v223
    %242 = vrot.lane.b32.xlu0 %v200, 96
    %v243 = vpop.permute.xlu0 %242
    %244 = vrot.lane.b32.xlu0 %v205, 96
    %v245 = vpop.permute.xlu0 %244
    %v247 = vsel %vm126, %v224, 0
    %v250 = vsel %vm126, %v225, 0
    %v253 = vsel %vm126, %v226, 0
    %v256 = vsel %vm126, %v227, 0
    %v259 = vsel %vm126, %v228, 0
    %v262 = vsel %vm126, %v229, 0
    %v265 = vsel %vm126, %v230, 0
    %v268 = vsel %vm126, %v231, 0
    %v271 = vsel %vm126, %v232, 0
    %v274 = vsel %vm126, %v233, 0
    %v277 = vsel %vm126, %v234, 0
    %v280 = vsel %vm126, %v235, 0
    %v283 = vsel %vm126, %v236, 0
    %v286 = vsel %vm126, %v237, 0
    %v289 = vsel %vm126, %v238, 0
    %v292 = vsel %vm126, %v239, 0
    %v294 = vsel %vm126, %v243, 0
    %v296 = vsel %vm126, %v245, 0
    %298 = vmatprep.subr.mxu0 0.0
    %299 = vmatpush1.xpose.msra.mxu0 %v294
    %300 = vmatprep.subr.mxu0 0.0
    %301 = vmatpush1.xpose.msra.mxu0 %v296
    %302 = vmatprep.subr.mxu0 0.0
    %303 = vmatpush1.xpose.msra.mxu0 0.0
    %304 = vmatprep.subr.mxu0 0.0
    %305 = vmatpush1.xpose.msra.mxu0 0.0
    %306 = vmatprep.subr.mxu0 0.0
    %307 = vmatpush1.xpose.msra.mxu0 0.0
    %308 = vmatprep.subr.mxu0 0.0
    %309 = vmatpush1.xpose.msra.mxu0 0.0
    %310 = vmatprep.subr.mxu0 0.0
    %311 = vmatpush1.xpose.msra.mxu0 0.0
    %312 = vmatprep.subr.mxu0 0.0
    %313 = vmatpush1.xpose.msra.mxu0 0.0
    %314 = vmatprep.subr.mxu0 0.0
    %315 = vmatpush1.xpose.msra.mxu0 0.0
    %316 = vmatprep.subr.mxu0 0.0
    %317 = vmatpush1.xpose.msra.mxu0 0.0
    %318 = vmatprep.subr.mxu0 0.0
    %319 = vmatpush1.xpose.msra.mxu0 0.0
    %320 = vmatprep.subr.mxu0 0.0
    %321 = vmatpush1.xpose.msra.mxu0 0.0
    %322 = vmatprep.subr.mxu0 0.0
    %323 = vmatpush1.xpose.msra.mxu0 0.0
    %324 = vmatprep.subr.mxu0 0.0
    %325 = vmatpush1.xpose.msra.mxu0 0.0
    %326 = vmatprep.subr.mxu0 0.0
    %327 = vmatpush1.xpose.msra.mxu0 0.0
    %328 = vmatprep.subr.mxu0 0.0
    %329 = vmatpush1.xpose.msra.mxu0 0.0
    %330 = vmatprep.subr.mxu0 0.0
    %331 = vmatpush1.xpose.msra.mxu0 0.0
    %332 = vmatprep.subr.mxu0 0.0
    %333 = vmatpush1.xpose.msra.mxu0 0.0
    %334 = vmatprep.subr.mxu0 0.0
    %335 = vmatpush1.xpose.msra.mxu0 0.0
    %336 = vmatprep.subr.mxu0 0.0
    %337 = vmatpush1.xpose.msra.mxu0 0.0
    %338 = vmatprep.subr.mxu0 0.0
    %339 = vmatpush1.xpose.msra.mxu0 0.0
    %340 = vmatprep.subr.mxu0 0.0
    %341 = vmatpush1.xpose.msra.mxu0 0.0
    %342 = vmatprep.subr.mxu0 0.0
    %343 = vmatpush1.xpose.msra.mxu0 0.0
    %344 = vmatprep.subr.mxu0 0.0
    %345 = vmatpush1.xpose.msra.mxu0 0.0
    %346 = vmatprep.subr.mxu0 0.0
    %347 = vmatpush1.xpose.msra.mxu0 0.0
    %348 = vmatprep.subr.mxu0 0.0
    %349 = vmatpush1.xpose.msra.mxu0 0.0
    %350 = vmatprep.subr.mxu0 0.0
    %351 = vmatpush1.xpose.msra.mxu0 0.0
    %352 = vmatprep.subr.mxu0 0.0
    %353 = vmatpush1.xpose.msra.mxu0 0.0
    %354 = vmatprep.subr.mxu0 0.0
    %355 = vmatpush1.xpose.msra.mxu0 0.0
    %356 = vmatprep.subr.mxu0 0.0
    %357 = vmatpush1.xpose.msra.mxu0 0.0
    %358 = vmatprep.subr.mxu0 0.0
    %359 = vmatpush1.xpose.msra.mxu0 0.0
    %360 = vmatprep.subr.mxu0 0.0
    %361 = vmatpush1.xpose.msra.mxu0 0.0
    %362 = vmatprep.mubr.f32.mxu0 0.0
    %363 = vmatmul.mubr.f32.gmra.mrb[0].mxu0 %v247
    %v364 = vpop.f32.mrb[0].mxu0
    %v365 = vadd.f32 0.0, %v364
    %v366 = vpop.f32.mrb[0].mxu0
    %367 = vmatprep.mubr.f32.mxu0 0.0
    %368 = vmatmul.mubr.f32.gmra.mrb[0].mxu0 %v250
    %v369 = vpop.f32.mrb[0].mxu0
    %v370 = vadd.f32 0.0, %v369
    %v371 = vpop.f32.mrb[0].mxu0
    %372 = vmatprep.mubr.f32.mxu0 0.0
    %373 = vmatmul.mubr.f32.gmra.mrb[0].mxu0 %v253
    %v374 = vpop.f32.mrb[0].mxu0
    %v375 = vadd.f32 0.0, %v374
    %v376 = vpop.f32.mrb[0].mxu0
    %377 = vmatprep.mubr.f32.mxu0 0.0
    %378 = vmatmul.mubr.f32.gmra.mrb[0].mxu0 %v256
    %v379 = vpop.f32.mrb[0].mxu0
    %v380 = vadd.f32 0.0, %v379
    %v381 = vpop.f32.mrb[0].mxu0
    %382 = vmatprep.mubr.f32.mxu0 0.0
    %383 = vmatmul.mubr.f32.gmra.mrb[0].mxu0 %v259
    %v384 = vpop.f32.mrb[0].mxu0
    %v385 = vadd.f32 0.0, %v384
    %v386 = vpop.f32.mrb[0].mxu0
    %387 = vmatprep.mubr.f32.mxu0 0.0
    %388 = vmatmul.mubr.f32.gmra.mrb[0].mxu0 %v262
    %v389 = vpop.f32.mrb[0].mxu0
    %v390 = vadd.f32 0.0, %v389
    %v391 = vpop.f32.mrb[0].mxu0
    %392 = vmatprep.mubr.f32.mxu0 0.0
    %393 = vmatmul.mubr.f32.gmra.mrb[0].mxu0 %v265
    %v394 = vpop.f32.mrb[0].mxu0
    %v395 = vadd.f32 0.0, %v394
    %v396 = vpop.f32.mrb[0].mxu0
    %397 = vmatprep.mubr.f32.mxu0 0.0
    %398 = vmatmul.mubr.f32.gmra.mrb[0].mxu0 %v268
    %v399 = vpop.f32.mrb[0].mxu0
    %v400 = vadd.f32 0.0, %v399
    %v401 = vpop.f32.mrb[0].mxu0
    %402 = vmatprep.mubr.f32.mxu0 0.0
    %403 = vmatmul.mubr.f32.gmra.mrb[0].mxu0 %v271
    %v404 = vpop.f32.mrb[0].mxu0
    %v405 = vadd.f32 0.0, %v404
    %v406 = vpop.f32.mrb[0].mxu0
    %407 = vmatprep.mubr.f32.mxu0 0.0
    %408 = vmatmul.mubr.f32.gmra.mrb[0].mxu0 %v274
    %v409 = vpop.f32.mrb[0].mxu0
    %v410 = vadd.f32 0.0, %v409
    %v411 = vpop.f32.mrb[0].mxu0
    %412 = vmatprep.mubr.f32.mxu0 0.0
    %413 = vmatmul.mubr.f32.gmra.mrb[0].mxu0 %v277
    %v414 = vpop.f32.mrb[0].mxu0
    %v415 = vadd.f32 0.0, %v414
    %v416 = vpop.f32.mrb[0].mxu0
    %417 = vmatprep.mubr.f32.mxu0 0.0
    %418 = vmatmul.mubr.f32.gmra.mrb[0].mxu0 %v280
    %v419 = vpop.f32.mrb[0].mxu0
    %v420 = vadd.f32 0.0, %v419
    %v421 = vpop.f32.mrb[0].mxu0
    %422 = vmatprep.mubr.f32.mxu0 0.0
    %423 = vmatmul.mubr.f32.gmra.mrb[0].mxu0 %v283
    %v424 = vpop.f32.mrb[0].mxu0
    %v425 = vadd.f32 0.0, %v424
    %v426 = vpop.f32.mrb[0].mxu0
    %427 = vmatprep.mubr.f32.mxu0 0.0
    %428 = vmatmul.mubr.f32.gmra.mrb[0].mxu0 %v286
    %v429 = vpop.f32.mrb[0].mxu0
    %v430 = vadd.f32 0.0, %v429
    %v431 = vpop.f32.mrb[0].mxu0
    %432 = vmatprep.mubr.f32.mxu0 0.0
    %433 = vmatmul.mubr.f32.gmra.mrb[0].mxu0 %v289
    %v434 = vpop.f32.mrb[0].mxu0
    %v435 = vadd.f32 0.0, %v434
    %v436 = vpop.f32.mrb[0].mxu0
    %437 = vmatprep.mubr.f32.mxu0 0.0
    %438 = vmatmul.mubr.f32.gmra.mrb[0].mxu0 %v292
    %v439 = vpop.f32.mrb[0].mxu0
    %v440 = vadd.f32 0.0, %v439
    %v441 = vpop.f32.mrb[0].mxu0
    %442 = vdwg.mxu0
    %v443 = vmul.f32 %v365, 0.5
    %v444 = vmul.f32 %v370, 0.5
    %v445 = vmul.f32 %v375, 0.5
    %v446 = vmul.f32 %v380, 0.5
    %v447 = vmul.f32 %v385, 0.5
    %v448 = vmul.f32 %v390, 0.5
    %v449 = vmul.f32 %v395, 0.5
    %v450 = vmul.f32 %v400, 0.5
    %v451 = vmul.f32 %v405, 0.5
    %v452 = vmul.f32 %v410, 0.5
    %v453 = vmul.f32 %v415, 0.5
    %v454 = vmul.f32 %v420, 0.5
    %v455 = vmul.f32 %v425, 0.5
    %v456 = vmul.f32 %v430, 0.5
    %v457 = vmul.f32 %v435, 0.5
    %v458 = vmul.f32 %v440, 0.5
    %v459 = vld [vmem:[%s2] sm:$0xff]
    %v460 = vld [vmem:[%s2 + $0x8] sm:$0xff]
    %v461 = vld [vmem:[%s2 + $0x10] sm:$0xff]
    %v462 = vld [vmem:[%s2 + $0x18] sm:$0xff]
    %v463 = vld [vmem:[%s2 + $0x20] sm:$0xff]
    %v464 = vld [vmem:[%s2 + $0x28] sm:$0xff]
    %v465 = vld [vmem:[%s2 + $0x30] sm:$0xff]
    %v466 = vld [vmem:[%s2 + $0x38] sm:$0xff]
    %v467 = vld [vmem:[%s2 + $0x40] sm:$0xff]
    %v468 = vld [vmem:[%s2 + $0x48] sm:$0xff]
    %v469 = vld [vmem:[%s2 + $0x50] sm:$0xff]
    %v470 = vld [vmem:[%s2 + $0x58] sm:$0xff]
    %v471 = vld [vmem:[%s2 + $0x60] sm:$0xff]
    %v472 = vld [vmem:[%s2 + $0x68] sm:$0xff]
    %v473 = vld [vmem:[%s2 + $0x70] sm:$0xff]
    %v474 = vld [vmem:[%s2 + $0x78] sm:$0xff]
    %v475 = vadd.f32 %v443, %v459
    %v476 = vadd.f32 %v444, %v460
    %v477 = vadd.f32 %v445, %v461
    %v478 = vadd.f32 %v446, %v462
    %v479 = vadd.f32 %v447, %v463
    %v480 = vadd.f32 %v448, %v464
    %v481 = vadd.f32 %v449, %v465
    %v482 = vadd.f32 %v450, %v466
    %v483 = vadd.f32 %v451, %v467
    %v484 = vadd.f32 %v452, %v468
    %v485 = vadd.f32 %v453, %v469
    %v486 = vadd.f32 %v454, %v470
    %v487 = vadd.f32 %v455, %v471
    %v488 = vadd.f32 %v456, %v472
    %v489 = vadd.f32 %v457, %v473
    %v490 = vadd.f32 %v458, %v474
    %vm491 = vcmask 130048
    %v492 = vsel %vm491, %v475, -inf
    %493 = vmax.xlane.f32.xlu0 %v492
    %v494 = vpop.xlane.xlu0 %493
    %v495 = vsel %vm491, %v476, -inf
    %496 = vmax.xlane.f32.xlu0 %v495
    %v497 = vpop.xlane.xlu0 %496
    %v498 = vsel %vm491, %v477, -inf
    %499 = vmax.xlane.f32.xlu0 %v498
    %v500 = vpop.xlane.xlu0 %499
    %v501 = vsel %vm491, %v478, -inf
    %502 = vmax.xlane.f32.xlu0 %v501
    %v503 = vpop.xlane.xlu0 %502
    %v504 = vsel %vm491, %v479, -inf
    %505 = vmax.xlane.f32.xlu0 %v504
    %v506 = vpop.xlane.xlu0 %505
    %v507 = vsel %vm491, %v480, -inf
    %508 = vmax.xlane.f32.xlu0 %v507
    %v509 = vpop.xlane.xlu0 %508
    %v510 = vsel %vm491, %v481, -inf
    %511 = vmax.xlane.f32.xlu0 %v510
    %v512 = vpop.xlane.xlu0 %511
    %v513 = vsel %vm491, %v482, -inf
    %514 = vmax.xlane.f32.xlu0 %v513
    %v515 = vpop.xlane.xlu0 %514
    %v516 = vsel %vm491, %v483, -inf
    %517 = vmax.xlane.f32.xlu0 %v516
    %v518 = vpop.xlane.xlu0 %517
    %v519 = vsel %vm491, %v484, -inf
    %520 = vmax.xlane.f32.xlu0 %v519
    %v521 = vpop.xlane.xlu0 %520
    %v522 = vsel %vm491, %v485, -inf
    %523 = vmax.xlane.f32.xlu0 %v522
    %v524 = vpop.xlane.xlu0 %523
    %v525 = vsel %vm491, %v486, -inf
    %526 = vmax.xlane.f32.xlu0 %v525
    %v527 = vpop.xlane.xlu0 %526
    %v528 = vsel %vm491, %v487, -inf
    %529 = vmax.xlane.f32.xlu0 %v528
    %v530 = vpop.xlane.xlu0 %529
    %v531 = vsel %vm491, %v488, -inf
    %532 = vmax.xlane.f32.xlu0 %v531
    %v533 = vpop.xlane.xlu0 %532
    %v534 = vsel %vm491, %v489, -inf
    %535 = vmax.xlane.f32.xlu0 %v534
    %v536 = vpop.xlane.xlu0 %535
    %v537 = vsel %vm491, %v490, -inf
    %538 = vmax.xlane.f32.xlu0 %v537
    %v539 = vpop.xlane.xlu0 %538
    %v540 = vsub.f32 %v475, %v494
    %v541 = vsub.f32 %v476, %v497
    %v542 = vsub.f32 %v477, %v500
    %v543 = vsub.f32 %v478, %v503
    %v544 = vsub.f32 %v479, %v506
    %v545 = vsub.f32 %v480, %v509
    %v546 = vsub.f32 %v481, %v512
    %v547 = vsub.f32 %v482, %v515
    %v548 = vsub.f32 %v483, %v518
    %v549 = vsub.f32 %v484, %v521
    %v550 = vsub.f32 %v485, %v524
    %v551 = vsub.f32 %v486, %v527
    %v552 = vsub.f32 %v487, %v530
    %v553 = vsub.f32 %v488, %v533
    %v554 = vsub.f32 %v489, %v536
    %v555 = vsub.f32 %v490, %v539
    %v556 = vmul.f32 %v540, 1.442695
    %v557 = vpow.pop %v556
    %v558 = vmul.f32 %v541, 1.442695
    %v559 = vpow.pop %v558
    %v560 = vmul.f32 %v542, 1.442695
    %v561 = vpow.pop %v560
    %v562 = vmul.f32 %v543, 1.442695
    %v563 = vpow.pop %v562
    %v564 = vmul.f32 %v544, 1.442695
    %v565 = vpow.pop %v564
    %v566 = vmul.f32 %v545, 1.442695
    %v567 = vpow.pop %v566
    %v568 = vmul.f32 %v546, 1.442695
    %v569 = vpow.pop %v568
    %v570 = vmul.f32 %v547, 1.442695
    %v571 = vpow.pop %v570
    %v572 = vmul.f32 %v548, 1.442695
    %v573 = vpow.pop %v572
    %v574 = vmul.f32 %v549, 1.442695
    %v575 = vpow.pop %v574
    %v576 = vmul.f32 %v550, 1.442695
    %v577 = vpow.pop %v576
    %v578 = vmul.f32 %v551, 1.442695
    %v579 = vpow.pop %v578
    %v580 = vmul.f32 %v552, 1.442695
    %v581 = vpow.pop %v580
    %v582 = vmul.f32 %v553, 1.442695
    %v583 = vpow.pop %v582
    %v584 = vmul.f32 %v554, 1.442695
    %v585 = vpow.pop %v584
    %v586 = vmul.f32 %v555, 1.442695
    %v587 = vpow.pop %v586
    %v588 = vsel %vm491, %v557, 0.0
    %589 = vadd.xlane.f32.xlu0 %v588
    %v590 = vpop.xlane.xlu0 %589
    %v591 = vsel %vm491, %v559, 0.0
    %592 = vadd.xlane.f32.xlu0 %v591
    %v593 = vpop.xlane.xlu0 %592
    %v594 = vsel %vm491, %v561, 0.0
    %595 = vadd.xlane.f32.xlu0 %v594
    %v596 = vpop.xlane.xlu0 %595
    %v597 = vsel %vm491, %v563, 0.0
    %598 = vadd.xlane.f32.xlu0 %v597
    %v599 = vpop.xlane.xlu0 %598
    %v600 = vsel %vm491, %v565, 0.0
    %601 = vadd.xlane.f32.xlu0 %v600
    %v602 = vpop.xlane.xlu0 %601
    %v603 = vsel %vm491, %v567, 0.0
    %604 = vadd.xlane.f32.xlu0 %v603
    %v605 = vpop.xlane.xlu0 %604
    %v606 = vsel %vm491, %v569, 0.0
    %607 = vadd.xlane.f32.xlu0 %v606
    %v608 = vpop.xlane.xlu0 %607
    %v609 = vsel %vm491, %v571, 0.0
    %610 = vadd.xlane.f32.xlu0 %v609
    %v611 = vpop.xlane.xlu0 %610
    %v612 = vsel %vm491, %v573, 0.0
    %613 = vadd.xlane.f32.xlu0 %v612
    %v614 = vpop.xlane.xlu0 %613
    %v615 = vsel %vm491, %v575, 0.0
    %616 = vadd.xlane.f32.xlu0 %v615
    %v617 = vpop.xlane.xlu0 %616
    %v618 = vsel %vm491, %v577, 0.0
    %619 = vadd.xlane.f32.xlu0 %v618
    %v620 = vpop.xlane.xlu0 %619
    %v621 = vsel %vm491, %v579, 0.0
    %622 = vadd.xlane.f32.xlu0 %v621
    %v623 = vpop.xlane.xlu0 %622
    %v624 = vsel %vm491, %v581, 0.0
    %625 = vadd.xlane.f32.xlu0 %v624
    %v626 = vpop.xlane.xlu0 %625
    %v627 = vsel %vm491, %v583, 0.0
    %628 = vadd.xlane.f32.xlu0 %v627
    %v629 = vpop.xlane.xlu0 %628
    %v630 = vsel %vm491, %v585, 0.0
    %631 = vadd.xlane.f32.xlu0 %v630
    %v632 = vpop.xlane.xlu0 %631
    %v633 = vsel %vm491, %v587, 0.0
    %634 = vadd.xlane.f32.xlu0 %v633
    %v635 = vpop.xlane.xlu0 %634
    %v636 = vrcp.pop %v590
    %v637 = vrcp.pop %v593
    %v638 = vrcp.pop %v596
    %v639 = vrcp.pop %v599
    %v640 = vrcp.pop %v602
    %v641 = vrcp.pop %v605
    %v642 = vrcp.pop %v608
    %v643 = vrcp.pop %v611
    %v644 = vrcp.pop %v614
    %v645 = vrcp.pop %v617
    %v646 = vrcp.pop %v620
    %v647 = vrcp.pop %v623
    %v648 = vrcp.pop %v626
    %v649 = vrcp.pop %v629
    %v650 = vrcp.pop %v632
    %v651 = vrcp.pop %v635
    %v652 = vmul.f32 %v557, %v636
    %v653 = vmul.f32 %v559, %v637
    %v654 = vmul.f32 %v561, %v638
    %v655 = vmul.f32 %v563, %v639
    %v656 = vmul.f32 %v565, %v640
    %v657 = vmul.f32 %v567, %v641
    %v658 = vmul.f32 %v569, %v642
    %v659 = vmul.f32 %v571, %v643
    %v660 = vmul.f32 %v573, %v644
    %v661 = vmul.f32 %v575, %v645
    %v662 = vmul.f32 %v577, %v646
    %v663 = vmul.f32 %v579, %v647
    %v664 = vmul.f32 %v581, %v648
    %v665 = vmul.f32 %v583, %v649
    %v666 = vmul.f32 %v585, %v650
    %v667 = vmul.f32 %v587, %v651
    %668 = vrot.lane.b32.xlu0 %v200, 64
    %v669 = vpop.permute.xlu0 %668
    %670 = vrot.lane.b32.xlu0 %v205, 64
    %v671 = vpop.permute.xlu0 %670
    %v675 = vsel %vm491, %v652, 0
    %v678 = vsel %vm491, %v653, 0
    %v681 = vsel %vm491, %v654, 0
    %v684 = vsel %vm491, %v655, 0
    %v687 = vsel %vm491, %v656, 0
    %v690 = vsel %vm491, %v657, 0
    %v693 = vsel %vm491, %v658, 0
    %v696 = vsel %vm491, %v659, 0
    %v699 = vsel %vm491, %v660, 0
    %v702 = vsel %vm491, %v661, 0
    %v705 = vsel %vm491, %v662, 0
    %v708 = vsel %vm491, %v663, 0
    %v711 = vsel %vm491, %v664, 0
    %v714 = vsel %vm491, %v665, 0
    %v717 = vsel %vm491, %v666, 0
    %v720 = vsel %vm491, %v667, 0
    %722 = vmatprep.subr.mxu0 0.0
    %723 = vmatpush1.msra.mxu0 %v669
    %724 = vmatprep.subr.mxu0 0.0
    %725 = vmatpush1.msra.mxu0 %v671
    %726 = vmatprep.subr.mxu0 0.0
    %727 = vmatpush1.msra.mxu0 0.0
    %728 = vmatprep.subr.mxu0 0.0
    %729 = vmatpush1.msra.mxu0 0.0
    %730 = vmatprep.subr.mxu0 0.0
    %731 = vmatpush1.msra.mxu0 0.0
    %732 = vmatprep.subr.mxu0 0.0
    %733 = vmatpush1.msra.mxu0 0.0
    %734 = vmatprep.subr.mxu0 0.0
    %735 = vmatpush1.msra.mxu0 0.0
    %736 = vmatprep.subr.mxu0 0.0
    %737 = vmatpush1.msra.mxu0 0.0
    %738 = vmatprep.subr.mxu0 0.0
    %739 = vmatpush1.msra.mxu0 0.0
    %740 = vmatprep.subr.mxu0 0.0
    %741 = vmatpush1.msra.mxu0 0.0
    %742 = vmatprep.subr.mxu0 0.0
    %743 = vmatpush1.msra.mxu0 0.0
    %744 = vmatprep.subr.mxu0 0.0
    %745 = vmatpush1.msra.mxu0 0.0
    %746 = vmatprep.subr.mxu0 0.0
    %747 = vmatpush1.msra.mxu0 0.0
    %748 = vmatprep.subr.mxu0 0.0
    %749 = vmatpush1.msra.mxu0 0.0
    %750 = vmatprep.subr.mxu0 0.0
    %751 = vmatpush1.msra.mxu0 0.0
    %752 = vmatprep.subr.mxu0 0.0
    %753 = vmatpush1.msra.mxu0 0.0
    %754 = vmatprep.subr.mxu0 0.0
    %755 = vmatpush1.msra.mxu0 0.0
    %756 = vmatprep.subr.mxu0 0.0
    %757 = vmatpush1.msra.mxu0 0.0
    %758 = vmatprep.subr.mxu0 0.0
    %759 = vmatpush1.msra.mxu0 0.0
    %760 = vmatprep.subr.mxu0 0.0
    %761 = vmatpush1.msra.mxu0 0.0
    %762 = vmatprep.subr.mxu0 0.0
    %763 = vmatpush1.msra.mxu0 0.0
    %764 = vmatprep.subr.mxu0 0.0
    %765 = vmatpush1.msra.mxu0 0.0
    %766 = vmatprep.subr.mxu0 0.0
    %767 = vmatpush1.msra.mxu0 0.0
    %768 = vmatprep.subr.mxu0 0.0
    %769 = vmatpush1.msra.mxu0 0.0
    %770 = vmatprep.subr.mxu0 0.0
    %771 = vmatpush1.msra.mxu0 0.0
    %772 = vmatprep.subr.mxu0 0.0
    %773 = vmatpush1.msra.mxu0 0.0
    %774 = vmatprep.subr.mxu0 0.0
    %775 = vmatpush1.msra.mxu0 0.0
    %776 = vmatprep.subr.mxu0 0.0
    %777 = vmatpush1.msra.mxu0 0.0
    %778 = vmatprep.subr.mxu0 0.0
    %779 = vmatpush1.msra.mxu0 0.0
    %780 = vmatprep.subr.mxu0 0.0
    %781 = vmatpush1.msra.mxu0 0.0
    %782 = vmatprep.subr.mxu0 0.0
    %783 = vmatpush1.msra.mxu0 0.0
    %784 = vmatprep.subr.mxu0 0.0
    %785 = vmatpush1.msra.mxu0 0.0
    %786 = vmatprep.mubr.f32.mxu0 0.0
    %787 = vmatmul.mubr.f32.gmra.mrb[0].mxu0 %v675
    %v788 = vpop.f32.mrb[0].mxu0
    %v789 = vadd.f32 0.0, %v788
    %v790 = vpop.f32.mrb[0].mxu0
    %791 = vmatprep.mubr.f32.mxu0 0.0
    %792 = vmatmul.mubr.f32.gmra.mrb[0].mxu0 %v678
    %v793 = vpop.f32.mrb[0].mxu0
    %v794 = vadd.f32 0.0, %v793
    %v795 = vpop.f32.mrb[0].mxu0
    %796 = vmatprep.mubr.f32.mxu0 0.0
    %797 = vmatmul.mubr.f32.gmra.mrb[0].mxu0 %v681
    %v798 = vpop.f32.mrb[0].mxu0
    %v799 = vadd.f32 0.0, %v798
    %v800 = vpop.f32.mrb[0].mxu0
    %801 = vmatprep.mubr.f32.mxu0 0.0
    %802 = vmatmul.mubr.f32.gmra.mrb[0].mxu0 %v684
    %v803 = vpop.f32.mrb[0].mxu0
    %v804 = vadd.f32 0.0, %v803
    %v805 = vpop.f32.mrb[0].mxu0
    %806 = vmatprep.mubr.f32.mxu0 0.0
    %807 = vmatmul.mubr.f32.gmra.mrb[0].mxu0 %v687
    %v808 = vpop.f32.mrb[0].mxu0
    %v809 = vadd.f32 0.0, %v808
    %v810 = vpop.f32.mrb[0].mxu0
    %811 = vmatprep.mubr.f32.mxu0 0.0
    %812 = vmatmul.mubr.f32.gmra.mrb[0].mxu0 %v690
    %v813 = vpop.f32.mrb[0].mxu0
    %v814 = vadd.f32 0.0, %v813
    %v815 = vpop.f32.mrb[0].mxu0
    %816 = vmatprep.mubr.f32.mxu0 0.0
    %817 = vmatmul.mubr.f32.gmra.mrb[0].mxu0 %v693
    %v818 = vpop.f32.mrb[0].mxu0
    %v819 = vadd.f32 0.0, %v818
    %v820 = vpop.f32.mrb[0].mxu0
    %821 = vmatprep.mubr.f32.mxu0 0.0
    %822 = vmatmul.mubr.f32.gmra.mrb[0].mxu0 %v696
    %v823 = vpop.f32.mrb[0].mxu0
    %v824 = vadd.f32 0.0, %v823
    %v825 = vpop.f32.mrb[0].mxu0
    %826 = vmatprep.mubr.f32.mxu0 0.0
    %827 = vmatmul.mubr.f32.gmra.mrb[0].mxu0 %v699
    %v828 = vpop.f32.mrb[0].mxu0
    %v829 = vadd.f32 0.0, %v828
    %v830 = vpop.f32.mrb[0].mxu0
    %831 = vmatprep.mubr.f32.mxu0 0.0
    %832 = vmatmul.mubr.f32.gmra.mrb[0].mxu0 %v702
    %v833 = vpop.f32.mrb[0].mxu0
    %v834 = vadd.f32 0.0, %v833
    %v835 = vpop.f32.mrb[0].mxu0
    %836 = vmatprep.mubr.f32.mxu0 0.0
    %837 = vmatmul.mubr.f32.gmra.mrb[0].mxu0 %v705
    %v838 = vpop.f32.mrb[0].mxu0
    %v839 = vadd.f32 0.0, %v838
    %v840 = vpop.f32.mrb[0].mxu0
    %841 = vmatprep.mubr.f32.mxu0 0.0
    %842 = vmatmul.mubr.f32.gmra.mrb[0].mxu0 %v708
    %v843 = vpop.f32.mrb[0].mxu0
    %v844 = vadd.f32 0.0, %v843
    %v845 = vpop.f32.mrb[0].mxu0
    %846 = vmatprep.mubr.f32.mxu0 0.0
    %847 = vmatmul.mubr.f32.gmra.mrb[0].mxu0 %v711
    %v848 = vpop.f32.mrb[0].mxu0
    %v849 = vadd.f32 0.0, %v848
    %v850 = vpop.f32.mrb[0].mxu0
    %851 = vmatprep.mubr.f32.mxu0 0.0
    %852 = vmatmul.mubr.f32.gmra.mrb[0].mxu0 %v714
    %v853 = vpop.f32.mrb[0].mxu0
    %v854 = vadd.f32 0.0, %v853
    %v855 = vpop.f32.mrb[0].mxu0
    %856 = vmatprep.mubr.f32.mxu0 0.0
    %857 = vmatmul.mubr.f32.gmra.mrb[0].mxu0 %v717
    %v858 = vpop.f32.mrb[0].mxu0
    %v859 = vadd.f32 0.0, %v858
    %v860 = vpop.f32.mrb[0].mxu0
    %861 = vmatprep.mubr.f32.mxu0 0.0
    %862 = vmatmul.mubr.f32.gmra.mrb[0].mxu0 %v720
    %v863 = vpop.f32.mrb[0].mxu0
    %v864 = vadd.f32 0.0, %v863
    %v865 = vpop.f32.mrb[0].mxu0
    %866 = vdwg.mxu0
    %v867 = vmul.f32 %v789, %v208
    %v868 = vmul.f32 %v794, %v209
    %v869 = vmul.f32 %v799, %v210
    %v870 = vmul.f32 %v804, %v211
    %v871 = vmul.f32 %v809, %v212
    %v872 = vmul.f32 %v814, %v213
    %v873 = vmul.f32 %v819, %v214
    %v874 = vmul.f32 %v824, %v215
    %v875 = vmul.f32 %v829, %v216
    %v876 = vmul.f32 %v834, %v217
    %v877 = vmul.f32 %v839, %v218
    %v878 = vmul.f32 %v844, %v219
    %v879 = vmul.f32 %v849, %v220
    %v880 = vmul.f32 %v854, %v221
    %v881 = vmul.f32 %v859, %v222
    %v882 = vmul.f32 %v864, %v223
    %v883 = vsel %vm126, %v867, 0.0
    %v884 = vsel %vm126, %v869, 0.0
    %v885 = vadd.f32 %v883, %v884
    %v886 = vsel %vm126, %v871, 0.0
    %v887 = vadd.f32 %v885, %v886
    %v888 = vsel %vm126, %v873, 0.0
    %v889 = vadd.f32 %v887, %v888
    %v890 = vsel %vm126, %v875, 0.0
    %v891 = vadd.f32 %v889, %v890
    %v892 = vsel %vm126, %v877, 0.0
    %v893 = vadd.f32 %v891, %v892
    %v894 = vsel %vm126, %v879, 0.0
    %v895 = vadd.f32 %v893, %v894
    %v896 = vsel %vm126, %v881, 0.0
    %v897 = vadd.f32 %v895, %v896
    %v898 = vsel %vm126, %v868, 0.0
    %v899 = vsel %vm126, %v870, 0.0
    %v900 = vadd.f32 %v898, %v899
    %v901 = vsel %vm126, %v872, 0.0
    %v902 = vadd.f32 %v900, %v901
    %v903 = vsel %vm126, %v874, 0.0
    %v904 = vadd.f32 %v902, %v903
    %v905 = vsel %vm126, %v876, 0.0
    %v906 = vadd.f32 %v904, %v905
    %v907 = vsel %vm126, %v878, 0.0
    %v908 = vadd.f32 %v906, %v907
    %v909 = vsel %vm126, %v880, 0.0
    %v910 = vadd.f32 %v908, %v909
    %v911 = vsel %vm126, %v882, 0.0
    %v912 = vadd.f32 %v910, %v911
    %v913 = vld [vmem:[%s5] sm:$0xff]
    %v914 = vld [vmem:[%s5 + $0x8] sm:$0xff]
    %v915 = vld [vmem:[%s5 + $0x10] sm:$0xff]
    %v916 = vld [vmem:[%s5 + $0x18] sm:$0xff]
    %v917 = vld [vmem:[%s6] sm:$0x1]
    %v919 = vlaneseq
    %v920 = vshrl.u32 %v919, 7
    %v921 = vsub.s32 0, %v920
    %v922 = vrot.slane %v917, %v921
    %v925 = vsel %vm126, %v897, 0
    %v928 = vsel %vm126, %v912, 0
    %930 = vmatprep.subr.mxu0 0.0
    %931 = vmatpush1.msra.mxu0 %v913
    %932 = vmatprep.subr.mxu0 0.0
    %933 = vmatpush1.msra.mxu0 %v914
    %934 = vmatprep.subr.mxu0 0.0
    %935 = vmatpush1.msra.mxu0 %v915
    %936 = vmatprep.subr.mxu0 0.0
    %937 = vmatpush1.msra.mxu0 %v916
    %938 = vmatprep.subr.mxu0 0.0
    %939 = vmatpush1.msra.mxu0 0.0
    %940 = vmatprep.subr.mxu0 0.0
    %941 = vmatpush1.msra.mxu0 0.0
    %942 = vmatprep.subr.mxu0 0.0
    %943 = vmatpush1.msra.mxu0 0.0
    %944 = vmatprep.subr.mxu0 0.0
    %945 = vmatpush1.msra.mxu0 0.0
    %946 = vmatprep.subr.mxu0 0.0
    %947 = vmatpush1.msra.mxu0 0.0
    %948 = vmatprep.subr.mxu0 0.0
    %949 = vmatpush1.msra.mxu0 0.0
    %950 = vmatprep.subr.mxu0 0.0
    %951 = vmatpush1.msra.mxu0 0.0
    %952 = vmatprep.subr.mxu0 0.0
    %953 = vmatpush1.msra.mxu0 0.0
    %954 = vmatprep.subr.mxu0 0.0
    %955 = vmatpush1.msra.mxu0 0.0
    %956 = vmatprep.subr.mxu0 0.0
    %957 = vmatpush1.msra.mxu0 0.0
    %958 = vmatprep.subr.mxu0 0.0
    %959 = vmatpush1.msra.mxu0 0.0
    %960 = vmatprep.subr.mxu0 0.0
    %961 = vmatpush1.msra.mxu0 0.0
    %962 = vmatprep.subr.mxu0 0.0
    %963 = vmatpush1.msra.mxu0 0.0
    %964 = vmatprep.subr.mxu0 0.0
    %965 = vmatpush1.msra.mxu0 0.0
    %966 = vmatprep.subr.mxu0 0.0
    %967 = vmatpush1.msra.mxu0 0.0
    %968 = vmatprep.subr.mxu0 0.0
    %969 = vmatpush1.msra.mxu0 0.0
    %970 = vmatprep.subr.mxu0 0.0
    %971 = vmatpush1.msra.mxu0 0.0
    %972 = vmatprep.subr.mxu0 0.0
    %973 = vmatpush1.msra.mxu0 0.0
    %974 = vmatprep.subr.mxu0 0.0
    %975 = vmatpush1.msra.mxu0 0.0
    %976 = vmatprep.subr.mxu0 0.0
    %977 = vmatpush1.msra.mxu0 0.0
    %978 = vmatprep.subr.mxu0 0.0
    %979 = vmatpush1.msra.mxu0 0.0
    %980 = vmatprep.subr.mxu0 0.0
    %981 = vmatpush1.msra.mxu0 0.0
    %982 = vmatprep.subr.mxu0 0.0
    %983 = vmatpush1.msra.mxu0 0.0
    %984 = vmatprep.subr.mxu0 0.0
    %985 = vmatpush1.msra.mxu0 0.0
    %986 = vmatprep.subr.mxu0 0.0
    %987 = vmatpush1.msra.mxu0 0.0
    %988 = vmatprep.subr.mxu0 0.0
    %989 = vmatpush1.msra.mxu0 0.0
    %990 = vmatprep.subr.mxu0 0.0
    %991 = vmatpush1.msra.mxu0 0.0
    %992 = vmatprep.subr.mxu0 0.0
    %993 = vmatpush1.msra.mxu0 0.0
    %994 = vmatprep.mubr.f32.mxu0 0.0
    %995 = vmatmul.mubr.f32.gmra.mrb[0].mxu0 %v925
    %v996 = vpop.f32.mrb[0].mxu0
    %v997 = vadd.f32 %v922, %v996
    %v998 = vpop.f32.mrb[0].mxu0
    %999 = vmatprep.mubr.f32.mxu0 0.0
    %1000 = vmatmul.mubr.f32.gmra.mrb[0].mxu0 %v928
    %v1001 = vpop.f32.mrb[0].mxu0
    %v1002 = vadd.f32 %v922, %v1001
    %v1003 = vpop.f32.mrb[0].mxu0
    %1004 = vdwg.mxu0
    %v1005 = vadd.f32 %v113, %v997
    %v1006 = vadd.f32 %v114, %v1002
    %v1007 = vsel %vm126, %v1005, 0.0
    %1008 = vadd.xlane.f32.xlu0 %v1007
    %v1009 = vpop.xlane.xlu0 %1008
    %v1010 = vsel %vm126, %v1006, 0.0
    %1011 = vadd.xlane.f32.xlu0 %v1010
    %v1012 = vpop.xlane.xlu0 %1011
    %v1013 = vrcp.pop 32.0
    %v1014 = vmul.f32 %v1009, %v1013
    %v1015 = vmul.f32 %v1012, %v1013
    %v1016 = vsub.f32 %v1005, %v1014
    %v1017 = vsub.f32 %v1006, %v1015
    %v1018 = vmul.f32 %v1016, %v1016
    %v1019 = vmul.f32 %v1017, %v1017
    %v1020 = vsel %vm126, %v1018, 0.0
    %1021 = vadd.xlane.f32.xlu0 %v1020
    %v1022 = vpop.xlane.xlu0 %1021
    %v1023 = vsel %vm126, %v1019, 0.0
    %1024 = vadd.xlane.f32.xlu0 %v1023
    %v1025 = vpop.xlane.xlu0 %1024
    %v1026 = vmul.f32 %v1022, %v1013
    %v1027 = vmul.f32 %v1025, %v1013
    %v1028 = vadd.f32 %v1026, 1e-05
    %v1029 = vadd.f32 %v1027, 1e-05
    %v1030 = vrsqrt.pop %v1028
    %v1031 = vrsqrt.pop %v1029
    %v1032 = vmul.f32 %v1016, %v1030
    %v1033 = vmul.f32 %v1017, %v1031
    %v1034 = vld [vmem:[%s7] sm:$0x1]
    %v1036 = vlaneseq
    %v1037 = vshrl.u32 %v1036, 7
    %v1038 = vsub.s32 0, %v1037
    %v1039 = vrot.slane %v1034, %v1038
    %v1041 = vmul.f32 %v1032, %v1039
    %v1042 = vmul.f32 %v1033, %v1039
    %v1043 = vld [vmem:[%s8] sm:$0x1]
    %v1045 = vlaneseq
    %v1046 = vshrl.u32 %v1045, 7
    %v1047 = vsub.s32 0, %v1046
    %v1048 = vrot.slane %v1043, %v1047
    %v1050 = vadd.f32 %v1041, %v1048
    %v1051 = vadd.f32 %v1042, %v1048
    %v1052 = vld [vmem:[#allocation5] sm:$0xff]
    %v1053 = vld [vmem:[#allocation5 + $0x8] sm:$0xff]
    %v1054 = vld [vmem:[#allocation5 + $0x10] sm:$0xff]
    %v1055 = vld [vmem:[#allocation5 + $0x18] sm:$0xff]
    %v1056 = vld [vmem:[%s10] sm:$0x1]
    %v1058 = vlaneseq
    %v1059 = vshrl.u32 %v1058, 7
    %v1060 = vsub.s32 0, %v1059
    %v1061 = vrot.slane %v1056, %v1060
    %v1064 = vsel %vm126, %v1050, 0
    %v1067 = vsel %vm126, %v1051, 0
    %1069 = vmatprep.subr.mxu0 0.0
    %1070 = vmatpush1.msra.mxu0 %v1052
    %1071 = vmatprep.subr.mxu0 0.0
    %1072 = vmatpush1.msra.mxu0 %v1053
    %1073 = vmatprep.subr.mxu0 0.0
    %1074 = vmatpush1.msra.mxu0 %v1054
    %1075 = vmatprep.subr.mxu0 0.0
    %1076 = vmatpush1.msra.mxu0 %v1055
    %1077 = vmatprep.subr.mxu0 0.0
    %1078 = vmatpush1.msra.mxu0 0.0
    %1079 = vmatprep.subr.mxu0 0.0
    %1080 = vmatpush1.msra.mxu0 0.0
    %1081 = vmatprep.subr.mxu0 0.0
    %1082 = vmatpush1.msra.mxu0 0.0
    %1083 = vmatprep.subr.mxu0 0.0
    %1084 = vmatpush1.msra.mxu0 0.0
    %1085 = vmatprep.subr.mxu0 0.0
    %1086 = vmatpush1.msra.mxu0 0.0
    %1087 = vmatprep.subr.mxu0 0.0
    %1088 = vmatpush1.msra.mxu0 0.0
    %1089 = vmatprep.subr.mxu0 0.0
    %1090 = vmatpush1.msra.mxu0 0.0
    %1091 = vmatprep.subr.mxu0 0.0
    %1092 = vmatpush1.msra.mxu0 0.0
    %1093 = vmatprep.subr.mxu0 0.0
    %1094 = vmatpush1.msra.mxu0 0.0
    %1095 = vmatprep.subr.mxu0 0.0
    %1096 = vmatpush1.msra.mxu0 0.0
    %1097 = vmatprep.subr.mxu0 0.0
    %1098 = vmatpush1.msra.mxu0 0.0
    %1099 = vmatprep.subr.mxu0 0.0
    %1100 = vmatpush1.msra.mxu0 0.0
    %1101 = vmatprep.subr.mxu0 0.0
    %1102 = vmatpush1.msra.mxu0 0.0
    %1103 = vmatprep.subr.mxu0 0.0
    %1104 = vmatpush1.msra.mxu0 0.0
    %1105 = vmatprep.subr.mxu0 0.0
    %1106 = vmatpush1.msra.mxu0 0.0
    %1107 = vmatprep.subr.mxu0 0.0
    %1108 = vmatpush1.msra.mxu0 0.0
    %1109 = vmatprep.subr.mxu0 0.0
    %1110 = vmatpush1.msra.mxu0 0.0
    %1111 = vmatprep.subr.mxu0 0.0
    %1112 = vmatpush1.msra.mxu0 0.0
    %1113 = vmatprep.subr.mxu0 0.0
    %1114 = vmatpush1.msra.mxu0 0.0
    %1115 = vmatprep.subr.mxu0 0.0
    %1116 = vmatpush1.msra.mxu0 0.0
    %1117 = vmatprep.subr.mxu0 0.0
    %1118 = vmatpush1.msra.mxu0 0.0
    %1119 = vmatprep.subr.mxu0 0.0
    %1120 = vmatpush1.msra.mxu0 0.0
    %1121 = vmatprep.subr.mxu0 0.0
    %1122 = vmatpush1.msra.mxu0 0.0
    %1123 = vmatprep.subr.mxu0 0.0
    %1124 = vmatpush1.msra.mxu0 0.0
    %1125 = vmatprep.subr.mxu0 0.0
    %1126 = vmatpush1.msra.mxu0 0.0
    %1127 = vmatprep.subr.mxu0 0.0
    %1128 = vmatpush1.msra.mxu0 0.0
    %1129 = vmatprep.subr.mxu0 0.0
    %1130 = vmatpush1.msra.mxu0 0.0
    %1131 = vmatprep.subr.mxu0 0.0
    %1132 = vmatpush1.msra.mxu0 0.0
    %1133 = vmatprep.mubr.f32.mxu0 0.0
    %1134 = vmatmul.mubr.f32.gmra.mrb[0].mxu0 %v1064
    %v1135 = vpop.f32.mrb[0].mxu0
    %v1136 = vadd.f32 %v1061, %v1135
    %v1137 = vpop.f32.mrb[0].mxu0
    %1138 = vmatprep.mubr.f32.mxu0 0.0
    %1139 = vmatmul.mubr.f32.gmra.mrb[0].mxu0 %v1067
    %v1140 = vpop.f32.mrb[0].mxu0
    %v1141 = vadd.f32 %v1061, %v1140
    %v1142 = vpop.f32.mrb[0].mxu0
    %1143 = vdwg.mxu0
    %v1144 = vmul.f32 %v1136, 0.5
    %v1145 = vmul.f32 %v1141, 0.5
    %v1146 = vmul.f32 %v1136, 0.044715
    %v1147 = vmul.f32 %v1141, 0.044715
    %v1148 = vmul.f32 %v1146, %v1136
    %v1149 = vmul.f32 %v1147, %v1141
    %v1150 = vmul.f32 %v1148, %v1136
    %v1151 = vmul.f32 %v1149, %v1141
    %v1152 = vadd.f32 %v1136, %v1150
    %v1153 = vadd.f32 %v1141, %v1151
    %v1154 = vmul.f32 %v1152, 0.7978846
    %v1155 = vmul.f32 %v1153, 0.7978846
    %v1156 = vtanh.pop %v1154
    %v1157 = vtanh.pop %v1155
    %v1158 = vadd.f32 %v1156, 1.0
    %v1159 = vadd.f32 %v1157, 1.0
    %v1160 = vmul.f32 %v1144, %v1158
    %v1161 = vmul.f32 %v1145, %v1159
    %v1162 = vld [vmem:[%s11] sm:$0xff]
    %v1163 = vld [vmem:[%s11 + $0x8] sm:$0xff]
    %v1164 = vld [vmem:[%s11 + $0x10] sm:$0xff]
    %v1165 = vld [vmem:[%s11 + $0x18] sm:$0xff]
    %v1166 = vld [vmem:[%s11 + $0x20] sm:$0xff]
    %v1167 = vld [vmem:[%s11 + $0x28] sm:$0xff]
    %v1168 = vld [vmem:[%s11 + $0x30] sm:$0xff]
    %v1169 = vld [vmem:[%s11 + $0x38] sm:$0xff]
    %v1170 = vld [vmem:[%s11 + $0x40] sm:$0xff]
    %v1171 = vld [vmem:[%s11 + $0x48] sm:$0xff]
    %v1172 = vld [vmem:[%s11 + $0x50] sm:$0xff]
    %v1173 = vld [vmem:[%s11 + $0x58] sm:$0xff]
    %v1174 = vld [vmem:[%s11 + $0x60] sm:$0xff]
    %v1175 = vld [vmem:[%s11 + $0x68] sm:$0xff]
    %v1176 = vld [vmem:[%s11 + $0x70] sm:$0xff]
    %v1177 = vld [vmem:[%s11 + $0x78] sm:$0xff]
    %v1178 = vld [vmem:[#allocation7] sm:$0x1]
    %v1180 = vlaneseq
    %v1181 = vshrl.u32 %v1180, 7
    %v1182 = vsub.s32 0, %v1181
    %v1183 = vrot.slane %v1178, %v1182
    %1185 = vmatprep.subr.mxu0 0.0
    %1186 = vmatpush1.msra.mxu0 %v1162
    %1187 = vmatprep.subr.mxu0 0.0
    %1188 = vmatpush1.msra.mxu0 %v1163
    %1189 = vmatprep.subr.mxu0 0.0
    %1190 = vmatpush1.msra.mxu0 %v1164
    %1191 = vmatprep.subr.mxu0 0.0
    %1192 = vmatpush1.msra.mxu0 %v1165
    %1193 = vmatprep.subr.mxu0 0.0
    %1194 = vmatpush1.msra.mxu0 %v1166
    %1195 = vmatprep.subr.mxu0 0.0
    %1196 = vmatpush1.msra.mxu0 %v1167
    %1197 = vmatprep.subr.mxu0 0.0
    %1198 = vmatpush1.msra.mxu0 %v1168
    %1199 = vmatprep.subr.mxu0 0.0
    %1200 = vmatpush1.msra.mxu0 %v1169
    %1201 = vmatprep.subr.mxu0 0.0
    %1202 = vmatpush1.msra.mxu0 %v1170
    %1203 = vmatprep.subr.mxu0 0.0
    %1204 = vmatpush1.msra.mxu0 %v1171
    %1205 = vmatprep.subr.mxu0 0.0
    %1206 = vmatpush1.msra.mxu0 %v1172
    %1207 = vmatprep.subr.mxu0 0.0
    %1208 = vmatpush1.msra.mxu0 %v1173
    %1209 = vmatprep.subr.mxu0 0.0
    %1210 = vmatpush1.msra.mxu0 %v1174
    %1211 = vmatprep.subr.mxu0 0.0
    %1212 = vmatpush1.msra.mxu0 %v1175
    %1213 = vmatprep.subr.mxu0 0.0
    %1214 = vmatpush1.msra.mxu0 %v1176
    %1215 = vmatprep.subr.mxu0 0.0
    %1216 = vmatpush1.msra.mxu0 %v1177
    %1217 = vmatprep.subr.mxu0 0.0
    %1218 = vmatpush1.msra.mxu0 0.0
    %1219 = vmatprep.subr.mxu0 0.0
    %1220 = vmatpush1.msra.mxu0 0.0
    %1221 = vmatprep.subr.mxu0 0.0
    %1222 = vmatpush1.msra.mxu0 0.0
    %1223 = vmatprep.subr.mxu0 0.0
    %1224 = vmatpush1.msra.mxu0 0.0
    %1225 = vmatprep.subr.mxu0 0.0
    %1226 = vmatpush1.msra.mxu0 0.0
    %1227 = vmatprep.subr.mxu0 0.0
    %1228 = vmatpush1.msra.mxu0 0.0
    %1229 = vmatprep.subr.mxu0 0.0
    %1230 = vmatpush1.msra.mxu0 0.0
    %1231 = vmatprep.subr.mxu0 0.0
    %1232 = vmatpush1.msra.mxu0 0.0
    %1233 = vmatprep.subr.mxu0 0.0
    %1234 = vmatpush1.msra.mxu0 0.0
    %1235 = vmatprep.subr.mxu0 0.0
    %1236 = vmatpush1.msra.mxu0 0.0
    %1237 = vmatprep.subr.mxu0 0.0
    %1238 = vmatpush1.msra.mxu0 0.0
    %1239 = vmatprep.subr.mxu0 0.0
    %1240 = vmatpush1.msra.mxu0 0.0
    %1241 = vmatprep.subr.mxu0 0.0
    %1242 = vmatpush1.msra.mxu0 0.0
    %1243 = vmatprep.subr.mxu0 0.0
    %1244 = vmatpush1.msra.mxu0 0.0
    %1245 = vmatprep.subr.mxu0 0.0
    %1246 = vmatpush1.msra.mxu0 0.0
    %1247 = vmatprep.subr.mxu0 0.0
    %1248 = vmatpush1.msra.mxu0 0.0
    %1249 = vmatprep.mubr.f32.mxu0 0.0
    %1250 = vmatmul.mubr.f32.gmra.mrb[0].mxu0 %v1160
    %v1251 = vpop.f32.mrb[0].mxu0
    %v1252 = vadd.f32 %v1183, %v1251
    %v1253 = vpop.f32.mrb[0].mxu0
    %1254 = vmatprep.mubr.f32.mxu0 0.0
    %1255 = vmatmul.mubr.f32.gmra.mrb[0].mxu0 %v1161
    %v1256 = vpop.f32.mrb[0].mxu0
    %v1257 = vadd.f32 %v1183, %v1256
    %v1258 = vpop.f32.mrb[0].mxu0
    %1259 = vdwg.mxu0
    %v1260 = vadd.f32 %v1050, %v1252
    %v1261 = vadd.f32 %v1051, %v1257
    %v1262 = vsel %vm126, %v1260, 0.0
    %1263 = vadd.xlane.f32.xlu0 %v1262
    %v1264 = vpop.xlane.xlu0 %1263
    %v1265 = vsel %vm126, %v1261, 0.0
    %1266 = vadd.xlane.f32.xlu0 %v1265
    %v1267 = vpop.xlane.xlu0 %1266
    %v1268 = vmul.f32 %v1264, %v1013
    %v1269 = vmul.f32 %v1267, %v1013
    %v1270 = vsub.f32 %v1260, %v1268
    %v1271 = vsub.f32 %v1261, %v1269
    %v1272 = vmul.f32 %v1270, %v1270
    %v1273 = vmul.f32 %v1271, %v1271
    %v1274 = vsel %vm126, %v1272, 0.0
    %1275 = vadd.xlane.f32.xlu0 %v1274
    %v1276 = vpop.xlane.xlu0 %1275
    %v1277 = vsel %vm126, %v1273, 0.0
    %1278 = vadd.xlane.f32.xlu0 %v1277
    %v1279 = vpop.xlane.xlu0 %1278
    %v1280 = vmul.f32 %v1276, %v1013
    %v1281 = vmul.f32 %v1279, %v1013
    %v1282 = vadd.f32 %v1280, 1e-05
    %v1283 = vadd.f32 %v1281, 1e-05
    %v1284 = vrsqrt.pop %v1282
    %v1285 = vrsqrt.pop %v1283
    %v1286 = vmul.f32 %v1270, %v1284
    %v1287 = vmul.f32 %v1271, %v1285
    %v1288 = vld [vmem:[#allocation8] sm:$0x1]
    %v1290 = vlaneseq
    %v1291 = vshrl.u32 %v1290, 7
    %v1292 = vsub.s32 0, %v1291
    %v1293 = vrot.slane %v1288, %v1292
    %v1295 = vmul.f32 %v1286, %v1293
    %v1296 = vmul.f32 %v1287, %v1293
    %v1297 = vld [vmem:[#allocation10] sm:$0x1]
    %v1299 = vlaneseq
    %v1300 = vshrl.u32 %v1299, 7
    %v1301 = vsub.s32 0, %v1300
    %v1302 = vrot.slane %v1297, %v1301
    %v1304 = vadd.f32 %v1295, %v1302
    %v1305 = vadd.f32 %v1296, %v1302
    %1306 = vst.msk [vmem:[#allocation11] sm:$0xff] %vm126, %v1304
    %1307 = vst.msk [vmem:[#allocation11 + $0x8] sm:$0xff] %vm126, %v1305
    // Predicated region
    $region82: #{trm_block.1} parent=1 // pred_check
      _
    $region83: #{trm_block.1} parent=1 // pred_check_branch
      %1309 = sbr.rel (0) target = $region85
    $region84: #{trm_block.1} parent=1 // pred_region
      %s1311 = ssub.s32 256, 256
      %1312 = vsyncadd [#allocation4], %s1311
      %s1313 = sshll.u32 [#allocation11], 4
      %s1314 = int_to_ptr.vmem [resolvable:$true] %s1313
      %1319 = dma.vmem_to_hbm [thread:$0]  %s1314, 256, %s15, [#allocation4], 128, 128, 8
    $region85: #{trm_block.1} parent=1 // pred_fallthru
      _
    // Predicated region
    $region86: #{trm_block.1} parent=1 // pred_check
      _
    $region87: #{trm_block.1} parent=1 // pred_check_branch
      %1321 = sbr.rel (0) target = $region89
    $region88: #{trm_block.1} parent=1 // pred_region
      %1322 = dma.done [#allocation4], 256
    $region89: #{trm_block.1} parent=1 // pred_fallthru
      _
    %1323 = vsyncpa [#allocation3], 1
    %1324 = vsyncpa [#allocation6], 1
    %1325 = vsyncpa [#allocation9], 1
    %1326 = vsyncpa [#allocation4], 1

</llo_original>
